<compile_context>
chip_gen: v7x
topology: tpu7x:2x2x1
jax: 0.10.0
libtpu: 0.0.40
codegen_flags: <defaults>
</compile_context>

<pallas_src>
import functools
import math

import jax
import jax.numpy as jnp
import numpy as np
from jax.experimental import pallas as pl
from jax.experimental.pallas import tpu as pltpu


# -----------------------------------------------------------------------------
# Pallas kernel: whole forward (2 GNN layers) in one program, everything in VMEM.
# -----------------------------------------------------------------------------
def gnn_kernel(x_ref, edge_ref, wn1_ref, we1_ref, wn2_ref, we2_ref,
               x_out_ref, edge_out_ref, *, n, b, c):
    x = x_ref[...]        # (b, n, c)
    edge = edge_ref[...]  # (b, n, n, c)   [i, j] <-> edge index e = i*n + j

    def bn(z, axes, eps=1e-5):
        # BatchNorm1d, training mode: per-"channel" stats over (batch, feature),
        # biased variance, gamma=1, beta=0.
        mean = jnp.mean(z, axis=axes, keepdims=True)
        var = jnp.mean(jnp.square(z - mean), axis=axes, keepdims=True)
        return (z - mean) * jax.lax.rsqrt(var + eps)

    def layer(x, edge, wn_ref, we_ref):
        res = x
        # One fused MXU matmul for A, B, U, V/n:  (b*n, c) @ (c, 4c)
        node = jnp.dot(x.reshape(b * n, c), wn_ref[...],
                       preferred_element_type=jnp.float32).reshape(b, n, 4 * c)
        Vix = node[:, :, 0 * c:1 * c]      # A(x)
        Vjx = node[:, :, 1 * c:2 * c]      # B(x)
        Uix = node[:, :, 2 * c:3 * c]      # U(x)
        Vx = node[:, :, 3 * c:4 * c]       # V(x) / n   (1/n folded into weights)

        # E(edge): one matmul  (b*n*n, c) @ (c, c)
        e = jnp.dot(edge.reshape(b * n * n, c), we_ref[...],
                    preferred_element_type=jnp.float32).reshape(b, n, n, c)

        # einsum('ev,bvc->bec', end,   Vix) == broadcast Vix over j (axis 2)
        # einsum('ev,bvc->bec', start, Vjx) == broadcast Vjx over i (axis 1)
        pre = Vix[:, :, None, :] + Vjx[:, None, :, :] + e            # (b, n, n, c)
        edge = edge + jax.nn.relu(bn(pre, (0, 3)))

        # sigmoid, then softmax over j (axis 2 of the (b, n, n, c) view)
        s = jax.nn.sigmoid(edge)
        m = jnp.max(s, axis=2, keepdims=True)
        ex = jnp.exp(s - m)
        p = ex / jnp.sum(ex, axis=2, keepdims=True)

        # Ujx = start @ (V(x)/n)  == broadcast Vx over i (axis 1)
        # end.T @ (p * Ujx)       == segment-sum over j (axis 2)
        agg = jnp.sum(p * Vx[:, None, :, :], axis=2)                 # (b, n, c)
        x = jax.nn.relu(res + bn(Uix + agg, (0, 2)))
        return x, edge

    x, edge = layer(x, edge, wn1_ref, we1_ref)
    x, edge = layer(x, edge, wn2_ref, we2_ref)

    x_out_ref[...] = x
    edge_out_ref[...] = edge


@functools.partial(jax.jit, static_argnums=(3,))
def gnn_forward(x, edge, weights, num_classes):
    B, N, C = x.shape
    assert N == num_classes and edge.shape == (B, N * N, C)

    # nn.Linear(bias=False): z @ W.T  -> pass W.T (c_in, c_out) to the kernel.
    def T(k):
        return weights[k].T

    inv_n = 1.0 / float(N)
    # Fuse node-side weights [A | B | U | V/n] along the output dim -> (C, 4C).
    wn1 = jnp.concatenate([T('A1'), T('B1'), T('U1'), T('V1') * inv_n], axis=1)
    wn2 = jnp.concatenate([T('A2'), T('B2'), T('U2'), T('V2') * inv_n], axis=1)
    we1, we2 = T('E1'), T('E2')

    edge4 = edge.reshape(B, N, N, C)   # free wrapper-side view; kernel works in 4-D

    vmem = pl.BlockSpec(memory_space=pltpu.MemorySpace.VMEM)
    kernel = functools.partial(gnn_kernel, n=N, b=B, c=C)
    x_out, edge_out4 = pl.pallas_call(
        kernel,
        out_shape=(jax.ShapeDtypeStruct((B, N, C), jnp.float32),
                   jax.ShapeDtypeStruct((B, N, N, C), jnp.float32)),
        in_specs=[vmem] * 6,
        out_specs=(vmem, vmem),
        input_output_aliases={1: 1},   # edge input buffer reused for edge output
    )(x, edge4, wn1, we1, wn2, we2)
    return x_out, edge_out4.reshape(B, N * N, C)


# -----------------------------------------------------------------------------
# Pure-JAX reference (mirrors the torch einsum formulation) for verification.
# -----------------------------------------------------------------------------
def create_e_matrix(n):
    """start[e, v] = 1 iff v == j(e);  end[e, v] = 1 iff v == i(e);  e = i*n + j."""
    end = np.zeros((n * n, n), np.float32)
    for i in range(n):
        end[i * n:(i + 1) * n, i] = 1.0
    start = np.tile(np.eye(n, dtype=np.float32), (n, 1))
    return jnp.asarray(start), jnp.asarray(end)


def gnn_ref(x, edge, weights, num_classes):
    n = num_classes
    start_m, end_m = create_e_matrix(n)

    def lin(z, W):  # W is torch-convention (out, in)
        return z @ W.T

    def bn(z, eps=1e-5):
        m = jnp.mean(z, axis=(0, 2), keepdims=True)
        v = jnp.mean((z - m) ** 2, axis=(0, 2), keepdims=True)
        return (z - m) / jnp.sqrt(v + eps)

    def layer(x, edge, wA, wB, wE, wU, wV):
        res = x
        Vix, Vjx, e = lin(x, wA), lin(x, wB), lin(edge, wE)
        edge = edge + jax.nn.relu(bn(jnp.einsum('ev,bvc->bec', end_m, Vix)
                                     + jnp.einsum('ev,bvc->bec', start_m, Vjx) + e))
        e = jax.nn.sigmoid(edge)
        b_, _, c = e.shape
        e = jax.nn.softmax(e.reshape(b_, n, n, c), axis=2).reshape(b_, n * n, c)
        Ujx = jnp.einsum('ev,bvc->bec', start_m, lin(x, wV))
        xn = lin(x, wU) + jnp.einsum('ve,bec->bvc', end_m.T, e * Ujx) / n
        xn = jax.nn.relu(res + bn(xn))
        return xn, edge

    x, edge = layer(x, edge, weights['A1'], weights['B1'], weights['E1'],
                    weights['U1'], weights['V1'])
    x, edge = layer(x, edge, weights['A2'], weights['B2'], weights['E2'],
                    weights['U2'], weights['V2'])
    return x, edge


if __name__ == "__main__":
    B, N_CLASSES, C = 2, 4, 64          # batch, num_classes, in_channels

    key = jax.random.PRNGKey(0)
    names = ['U1', 'V1', 'A1', 'B1', 'E1', 'U2', 'V2', 'A2', 'B2', 'E2']
    keys = jax.random.split(key, len(names) + 2)
    scale = math.sqrt(2.0 / C)          # init_weights_linear(dim_in, gain=1)
    weights = {nm: scale * jax.random.normal(k, (C, C), jnp.float32)
               for nm, k in zip(names, keys[:len(names)])}

    x = jax.random.normal(keys[-2], (B, N_CLASSES, C), jnp.float32)
    edge = jax.random.normal(keys[-1], (B, N_CLASSES * N_CLASSES, C), jnp.float32)

    x_out, edge_out = gnn_forward(x, edge, weights, N_CLASSES)
    jax.block_until_ready((x_out, edge_out))

    x_ref, edge_ref = gnn_ref(x, edge, weights, N_CLASSES)
    np.testing.assert_allclose(np.asarray(x_out), np.asarray(x_ref), rtol=2e-4, atol=2e-4)
    np.testing.assert_allclose(np.asarray(edge_out), np.asarray(edge_ref), rtol=2e-4, atol=2e-4)

    print("KERNEL_OK")
</pallas_src>

<mosaic_0001>
module attributes {stable_mosaic.version = 11 : i64} {
  func.func @gnn_kernel(%arg0: memref<2x4x64xf32, #tpu.memory_space<vmem>>, %arg1: memref<2x4x4x64xf32, #tpu.memory_space<vmem>>, %arg2: memref<64x256xf32, #tpu.memory_space<vmem>>, %arg3: memref<64x64xf32, #tpu.memory_space<vmem>>, %arg4: memref<64x256xf32, #tpu.memory_space<vmem>>, %arg5: memref<64x64xf32, #tpu.memory_space<vmem>>, %arg6: memref<2x4x64xf32, #tpu.memory_space<vmem>>, %arg7: memref<2x4x4x64xf32, #tpu.memory_space<vmem>>) attributes {dimension_semantics = [], scalar_prefetch = 0 : i64, scratch_operands = 0 : i64, tpu.core_type = #tpu.core_type<tc>} {
    %c0 = arith.constant 0 : index
    %c0_0 = arith.constant 0 : index
    %c0_1 = arith.constant 0 : index
    %0 = vector.load %arg0[%c0, %c0_0, %c0_1] : memref<2x4x64xf32, #tpu.memory_space<vmem>>, vector<2x4x64xf32>
    %c0_2 = arith.constant 0 : index
    %c0_3 = arith.constant 0 : index
    %c0_4 = arith.constant 0 : index
    %c0_5 = arith.constant 0 : index
    %1 = vector.load %arg1[%c0_2, %c0_3, %c0_4, %c0_5] : memref<2x4x4x64xf32, #tpu.memory_space<vmem>>, vector<2x4x4x64xf32>
    %2 = vector.shape_cast %0 : vector<2x4x64xf32> to vector<8x64xf32>
    %c0_6 = arith.constant 0 : index
    %c0_7 = arith.constant 0 : index
    %3 = vector.load %arg2[%c0_6, %c0_7] : memref<64x256xf32, #tpu.memory_space<vmem>>, vector<64x256xf32>
    %cst = arith.constant dense<0.000000e+00> : vector<8x256xf32>
    %4 = tpu.matmul %2, %3, %cst {dimension_numbers = #tpu.dot_dimension_numbers<[1], [0], [0], [1], [0, 0, 1, 1], [], []>} : vector<8x64xf32>, vector<64x256xf32>, vector<8x256xf32> -> vector<8x256xf32>
    %5 = vector.shape_cast %4 : vector<8x256xf32> to vector<2x4x256xf32>
    %6 = vector.extract_strided_slice %5 {offsets = [0, 0, 0], sizes = [2, 4, 64], strides = [1, 1, 1]} : vector<2x4x256xf32> to vector<2x4x64xf32>
    %7 = vector.extract_strided_slice %5 {offsets = [0, 0, 64], sizes = [2, 4, 64], strides = [1, 1, 1]} : vector<2x4x256xf32> to vector<2x4x64xf32>
    %8 = vector.extract_strided_slice %5 {offsets = [0, 0, 128], sizes = [2, 4, 64], strides = [1, 1, 1]} : vector<2x4x256xf32> to vector<2x4x64xf32>
    %9 = vector.extract_strided_slice %5 {offsets = [0, 0, 192], sizes = [2, 4, 64], strides = [1, 1, 1]} : vector<2x4x256xf32> to vector<2x4x64xf32>
    %10 = vector.shape_cast %1 : vector<2x4x4x64xf32> to vector<32x64xf32>
    %c0_8 = arith.constant 0 : index
    %c0_9 = arith.constant 0 : index
    %11 = vector.load %arg3[%c0_8, %c0_9] : memref<64x64xf32, #tpu.memory_space<vmem>>, vector<64x64xf32>
    %cst_10 = arith.constant dense<0.000000e+00> : vector<32x64xf32>
    %12 = tpu.matmul %10, %11, %cst_10 {dimension_numbers = #tpu.dot_dimension_numbers<[1], [0], [0], [1], [0, 0, 1, 1], [], []>} : vector<32x64xf32>, vector<64x64xf32>, vector<32x64xf32> -> vector<32x64xf32>
    %13 = vector.shape_cast %12 : vector<32x64xf32> to vector<2x4x4x64xf32>
    %14 = vector.shape_cast %6 : vector<2x4x64xf32> to vector<2x4x1x64xf32>
    %15 = vector.shape_cast %7 : vector<2x4x64xf32> to vector<2x1x4x64xf32>
    %16 = vector.broadcast %14 : vector<2x4x1x64xf32> to vector<2x4x4x64xf32>
    %17 = vector.broadcast %15 : vector<2x1x4x64xf32> to vector<2x4x4x64xf32>
    %18 = arith.addf %16, %17 : vector<2x4x4x64xf32>
    %19 = arith.addf %18, %13 : vector<2x4x4x64xf32>
    %cst_11 = arith.constant dense<0.000000e+00> : vector<4x4xf32>
    %20 = vector.multi_reduction <add>, %19, %cst_11 [0, 3] : vector<2x4x4x64xf32> to vector<4x4xf32>
    %21 = vector.shape_cast %20 : vector<4x4xf32> to vector<1x4x4x1xf32>
    %cst_12 = arith.constant 1.280000e+02 : f32
    %22 = vector.broadcast %cst_12 : f32 to vector<1x4x4x1xf32>
    %23 = arith.divf %21, %22 : vector<1x4x4x1xf32>
    %24 = vector.broadcast %23 : vector<1x4x4x1xf32> to vector<2x4x4x64xf32>
    %25 = arith.subf %19, %24 : vector<2x4x4x64xf32>
    %26 = arith.mulf %25, %25 : vector<2x4x4x64xf32>
    %cst_13 = arith.constant dense<0.000000e+00> : vector<4x4xf32>
    %27 = vector.multi_reduction <add>, %26, %cst_13 [0, 3] : vector<2x4x4x64xf32> to vector<4x4xf32>
    %28 = vector.shape_cast %27 : vector<4x4xf32> to vector<1x4x4x1xf32>
    %cst_14 = arith.constant 1.280000e+02 : f32
    %29 = vector.broadcast %cst_14 : f32 to vector<1x4x4x1xf32>
    %30 = arith.divf %28, %29 : vector<1x4x4x1xf32>
    %31 = vector.broadcast %23 : vector<1x4x4x1xf32> to vector<2x4x4x64xf32>
    %32 = arith.subf %19, %31 : vector<2x4x4x64xf32>
    %cst_15 = arith.constant 9.99999974E-6 : f32
    %33 = vector.broadcast %cst_15 : f32 to vector<1x4x4x1xf32>
    %34 = arith.addf %30, %33 : vector<1x4x4x1xf32>
    %35 = math.rsqrt %34 : vector<1x4x4x1xf32>
    %36 = vector.broadcast %35 : vector<1x4x4x1xf32> to vector<2x4x4x64xf32>
    %37 = arith.mulf %32, %36 : vector<2x4x4x64xf32>
    %cst_16 = arith.constant 0.000000e+00 : f32
    %38 = vector.broadcast %cst_16 : f32 to vector<2x4x4x64xf32>
    %39 = arith.maximumf %37, %38 : vector<2x4x4x64xf32>
    %40 = arith.addf %1, %39 : vector<2x4x4x64xf32>
    %41 = arith.negf %40 : vector<2x4x4x64xf32>
    %42 = math.exp %41 : vector<2x4x4x64xf32>
    %cst_17 = arith.constant 1.000000e+00 : f32
    %43 = vector.broadcast %cst_17 : f32 to vector<2x4x4x64xf32>
    %44 = arith.addf %43, %42 : vector<2x4x4x64xf32>
    %45 = arith.divf %43, %44 : vector<2x4x4x64xf32>
    %cst_18 = arith.constant dense<0xFF800000> : vector<2x4x64xf32>
    %46 = vector.multi_reduction <maximumf>, %45, %cst_18 [2] : vector<2x4x4x64xf32> to vector<2x4x64xf32>
    %47 = vector.shape_cast %46 : vector<2x4x64xf32> to vector<2x4x1x64xf32>
    %48 = vector.broadcast %47 : vector<2x4x1x64xf32> to vector<2x4x4x64xf32>
    %49 = arith.subf %45, %48 : vector<2x4x4x64xf32>
    %50 = math.exp %49 : vector<2x4x4x64xf32>
    %cst_19 = arith.constant dense<0.000000e+00> : vector<2x4x64xf32>
    %51 = vector.multi_reduction <add>, %50, %cst_19 [2] : vector<2x4x4x64xf32> to vector<2x4x64xf32>
    %52 = vector.shape_cast %51 : vector<2x4x64xf32> to vector<2x4x1x64xf32>
    %53 = vector.broadcast %52 : vector<2x4x1x64xf32> to vector<2x4x4x64xf32>
    %54 = arith.divf %50, %53 : vector<2x4x4x64xf32>
    %55 = vector.shape_cast %9 : vector<2x4x64xf32> to vector<2x1x4x64xf32>
    %56 = vector.broadcast %55 : vector<2x1x4x64xf32> to vector<2x4x4x64xf32>
    %57 = arith.mulf %54, %56 : vector<2x4x4x64xf32>
    %cst_20 = arith.constant dense<0.000000e+00> : vector<2x4x64xf32>
    %58 = vector.multi_reduction <add>, %57, %cst_20 [2] : vector<2x4x4x64xf32> to vector<2x4x64xf32>
    %59 = arith.addf %8, %58 : vector<2x4x64xf32>
    %cst_21 = arith.constant dense<0.000000e+00> : vector<4xf32>
    %60 = vector.multi_reduction <add>, %59, %cst_21 [0, 2] : vector<2x4x64xf32> to vector<4xf32>
    %61 = vector.shape_cast %60 : vector<4xf32> to vector<1x4x1xf32>
    %cst_22 = arith.constant 1.280000e+02 : f32
    %62 = vector.broadcast %cst_22 : f32 to vector<1x4x1xf32>
    %63 = arith.divf %61, %62 : vector<1x4x1xf32>
    %64 = vector.broadcast %63 : vector<1x4x1xf32> to vector<2x4x64xf32>
    %65 = arith.subf %59, %64 : vector<2x4x64xf32>
    %66 = arith.mulf %65, %65 : vector<2x4x64xf32>
    %cst_23 = arith.constant dense<0.000000e+00> : vector<4xf32>
    %67 = vector.multi_reduction <add>, %66, %cst_23 [0, 2] : vector<2x4x64xf32> to vector<4xf32>
    %68 = vector.shape_cast %67 : vector<4xf32> to vector<1x4x1xf32>
    %cst_24 = arith.constant 1.280000e+02 : f32
    %69 = vector.broadcast %cst_24 : f32 to vector<1x4x1xf32>
    %70 = arith.divf %68, %69 : vector<1x4x1xf32>
    %71 = vector.broadcast %63 : vector<1x4x1xf32> to vector<2x4x64xf32>
    %72 = arith.subf %59, %71 : vector<2x4x64xf32>
    %cst_25 = arith.constant 9.99999974E-6 : f32
    %73 = vector.broadcast %cst_25 : f32 to vector<1x4x1xf32>
    %74 = arith.addf %70, %73 : vector<1x4x1xf32>
    %75 = math.rsqrt %74 : vector<1x4x1xf32>
    %76 = vector.broadcast %75 : vector<1x4x1xf32> to vector<2x4x64xf32>
    %77 = arith.mulf %72, %76 : vector<2x4x64xf32>
    %78 = arith.addf %0, %77 : vector<2x4x64xf32>
    %cst_26 = arith.constant 0.000000e+00 : f32
    %79 = vector.broadcast %cst_26 : f32 to vector<2x4x64xf32>
    %80 = arith.maximumf %78, %79 : vector<2x4x64xf32>
    %81 = vector.shape_cast %80 : vector<2x4x64xf32> to vector<8x64xf32>
    %c0_27 = arith.constant 0 : index
    %c0_28 = arith.constant 0 : index
    %82 = vector.load %arg4[%c0_27, %c0_28] : memref<64x256xf32, #tpu.memory_space<vmem>>, vector<64x256xf32>
    %cst_29 = arith.constant dense<0.000000e+00> : vector<8x256xf32>
    %83 = tpu.matmul %81, %82, %cst_29 {dimension_numbers = #tpu.dot_dimension_numbers<[1], [0], [0], [1], [0, 0, 1, 1], [], []>} : vector<8x64xf32>, vector<64x256xf32>, vector<8x256xf32> -> vector<8x256xf32>
    %84 = vector.shape_cast %83 : vector<8x256xf32> to vector<2x4x256xf32>
    %85 = vector.extract_strided_slice %84 {offsets = [0, 0, 0], sizes = [2, 4, 64], strides = [1, 1, 1]} : vector<2x4x256xf32> to vector<2x4x64xf32>
    %86 = vector.extract_strided_slice %84 {offsets = [0, 0, 64], sizes = [2, 4, 64], strides = [1, 1, 1]} : vector<2x4x256xf32> to vector<2x4x64xf32>
    %87 = vector.extract_strided_slice %84 {offsets = [0, 0, 128], sizes = [2, 4, 64], strides = [1, 1, 1]} : vector<2x4x256xf32> to vector<2x4x64xf32>
    %88 = vector.extract_strided_slice %84 {offsets = [0, 0, 192], sizes = [2, 4, 64], strides = [1, 1, 1]} : vector<2x4x256xf32> to vector<2x4x64xf32>
    %89 = vector.shape_cast %40 : vector<2x4x4x64xf32> to vector<32x64xf32>
    %c0_30 = arith.constant 0 : index
    %c0_31 = arith.constant 0 : index
    %90 = vector.load %arg5[%c0_30, %c0_31] : memref<64x64xf32, #tpu.memory_space<vmem>>, vector<64x64xf32>
    %cst_32 = arith.constant dense<0.000000e+00> : vector<32x64xf32>
    %91 = tpu.matmul %89, %90, %cst_32 {dimension_numbers = #tpu.dot_dimension_numbers<[1], [0], [0], [1], [0, 0, 1, 1], [], []>} : vector<32x64xf32>, vector<64x64xf32>, vector<32x64xf32> -> vector<32x64xf32>
    %92 = vector.shape_cast %91 : vector<32x64xf32> to vector<2x4x4x64xf32>
    %93 = vector.shape_cast %85 : vector<2x4x64xf32> to vector<2x4x1x64xf32>
    %94 = vector.shape_cast %86 : vector<2x4x64xf32> to vector<2x1x4x64xf32>
    %95 = vector.broadcast %93 : vector<2x4x1x64xf32> to vector<2x4x4x64xf32>
    %96 = vector.broadcast %94 : vector<2x1x4x64xf32> to vector<2x4x4x64xf32>
    %97 = arith.addf %95, %96 : vector<2x4x4x64xf32>
    %98 = arith.addf %97, %92 : vector<2x4x4x64xf32>
    %cst_33 = arith.constant dense<0.000000e+00> : vector<4x4xf32>
    %99 = vector.multi_reduction <add>, %98, %cst_33 [0, 3] : vector<2x4x4x64xf32> to vector<4x4xf32>
    %100 = vector.shape_cast %99 : vector<4x4xf32> to vector<1x4x4x1xf32>
    %cst_34 = arith.constant 1.280000e+02 : f32
    %101 = vector.broadcast %cst_34 : f32 to vector<1x4x4x1xf32>
    %102 = arith.divf %100, %101 : vector<1x4x4x1xf32>
    %103 = vector.broadcast %102 : vector<1x4x4x1xf32> to vector<2x4x4x64xf32>
    %104 = arith.subf %98, %103 : vector<2x4x4x64xf32>
    %105 = arith.mulf %104, %104 : vector<2x4x4x64xf32>
    %cst_35 = arith.constant dense<0.000000e+00> : vector<4x4xf32>
    %106 = vector.multi_reduction <add>, %105, %cst_35 [0, 3] : vector<2x4x4x64xf32> to vector<4x4xf32>
    %107 = vector.shape_cast %106 : vector<4x4xf32> to vector<1x4x4x1xf32>
    %cst_36 = arith.constant 1.280000e+02 : f32
    %108 = vector.broadcast %cst_36 : f32 to vector<1x4x4x1xf32>
    %109 = arith.divf %107, %108 : vector<1x4x4x1xf32>
    %110 = vector.broadcast %102 : vector<1x4x4x1xf32> to vector<2x4x4x64xf32>
    %111 = arith.subf %98, %110 : vector<2x4x4x64xf32>
    %cst_37 = arith.constant 9.99999974E-6 : f32
    %112 = vector.broadcast %cst_37 : f32 to vector<1x4x4x1xf32>
    %113 = arith.addf %109, %112 : vector<1x4x4x1xf32>
    %114 = math.rsqrt %113 : vector<1x4x4x1xf32>
    %115 = vector.broadcast %114 : vector<1x4x4x1xf32> to vector<2x4x4x64xf32>
    %116 = arith.mulf %111, %115 : vector<2x4x4x64xf32>
    %cst_38 = arith.constant 0.000000e+00 : f32
    %117 = vector.broadcast %cst_38 : f32 to vector<2x4x4x64xf32>
    %118 = arith.maximumf %116, %117 : vector<2x4x4x64xf32>
    %119 = arith.addf %40, %118 : vector<2x4x4x64xf32>
    %120 = arith.negf %119 : vector<2x4x4x64xf32>
    %121 = math.exp %120 : vector<2x4x4x64xf32>
    %cst_39 = arith.constant 1.000000e+00 : f32
    %122 = vector.broadcast %cst_39 : f32 to vector<2x4x4x64xf32>
    %123 = arith.addf %122, %121 : vector<2x4x4x64xf32>
    %124 = arith.divf %122, %123 : vector<2x4x4x64xf32>
    %cst_40 = arith.constant dense<0xFF800000> : vector<2x4x64xf32>
    %125 = vector.multi_reduction <maximumf>, %124, %cst_40 [2] : vector<2x4x4x64xf32> to vector<2x4x64xf32>
    %126 = vector.shape_cast %125 : vector<2x4x64xf32> to vector<2x4x1x64xf32>
    %127 = vector.broadcast %126 : vector<2x4x1x64xf32> to vector<2x4x4x64xf32>
    %128 = arith.subf %124, %127 : vector<2x4x4x64xf32>
    %129 = math.exp %128 : vector<2x4x4x64xf32>
    %cst_41 = arith.constant dense<0.000000e+00> : vector<2x4x64xf32>
    %130 = vector.multi_reduction <add>, %129, %cst_41 [2] : vector<2x4x4x64xf32> to vector<2x4x64xf32>
    %131 = vector.shape_cast %130 : vector<2x4x64xf32> to vector<2x4x1x64xf32>
    %132 = vector.broadcast %131 : vector<2x4x1x64xf32> to vector<2x4x4x64xf32>
    %133 = arith.divf %129, %132 : vector<2x4x4x64xf32>
    %134 = vector.shape_cast %88 : vector<2x4x64xf32> to vector<2x1x4x64xf32>
    %135 = vector.broadcast %134 : vector<2x1x4x64xf32> to vector<2x4x4x64xf32>
    %136 = arith.mulf %133, %135 : vector<2x4x4x64xf32>
    %cst_42 = arith.constant dense<0.000000e+00> : vector<2x4x64xf32>
    %137 = vector.multi_reduction <add>, %136, %cst_42 [2] : vector<2x4x4x64xf32> to vector<2x4x64xf32>
    %138 = arith.addf %87, %137 : vector<2x4x64xf32>
    %cst_43 = arith.constant dense<0.000000e+00> : vector<4xf32>
    %139 = vector.multi_reduction <add>, %138, %cst_43 [0, 2] : vector<2x4x64xf32> to vector<4xf32>
    %140 = vector.shape_cast %139 : vector<4xf32> to vector<1x4x1xf32>
    %cst_44 = arith.constant 1.280000e+02 : f32
    %141 = vector.broadcast %cst_44 : f32 to vector<1x4x1xf32>
    %142 = arith.divf %140, %141 : vector<1x4x1xf32>
    %143 = vector.broadcast %142 : vector<1x4x1xf32> to vector<2x4x64xf32>
    %144 = arith.subf %138, %143 : vector<2x4x64xf32>
    %145 = arith.mulf %144, %144 : vector<2x4x64xf32>
    %cst_45 = arith.constant dense<0.000000e+00> : vector<4xf32>
    %146 = vector.multi_reduction <add>, %145, %cst_45 [0, 2] : vector<2x4x64xf32> to vector<4xf32>
    %147 = vector.shape_cast %146 : vector<4xf32> to vector<1x4x1xf32>
    %cst_46 = arith.constant 1.280000e+02 : f32
    %148 = vector.broadcast %cst_46 : f32 to vector<1x4x1xf32>
    %149 = arith.divf %147, %148 : vector<1x4x1xf32>
    %150 = vector.broadcast %142 : vector<1x4x1xf32> to vector<2x4x64xf32>
    %151 = arith.subf %138, %150 : vector<2x4x64xf32>
    %cst_47 = arith.constant 9.99999974E-6 : f32
    %152 = vector.broadcast %cst_47 : f32 to vector<1x4x1xf32>
    %153 = arith.addf %149, %152 : vector<1x4x1xf32>
    %154 = math.rsqrt %153 : vector<1x4x1xf32>
    %155 = vector.broadcast %154 : vector<1x4x1xf32> to vector<2x4x64xf32>
    %156 = arith.mulf %151, %155 : vector<2x4x64xf32>
    %157 = arith.addf %80, %156 : vector<2x4x64xf32>
    %cst_48 = arith.constant 0.000000e+00 : f32
    %158 = vector.broadcast %cst_48 : f32 to vector<2x4x64xf32>
    %159 = arith.maximumf %157, %158 : vector<2x4x64xf32>
    %c0_49 = arith.constant 0 : index
    %c0_50 = arith.constant 0 : index
    %c0_51 = arith.constant 0 : index
    %160 = vector.load %arg6[%c0_49, %c0_50, %c0_51] : memref<2x4x64xf32, #tpu.memory_space<vmem>>, vector<2x4x64xf32>
    tpu.vector_store %arg6[%c0_49, %c0_50, %c0_51], %159 {strides = array<i32>} : memref<2x4x64xf32, #tpu.memory_space<vmem>>, vector<2x4x64xf32>,
    %c0_52 = arith.constant 0 : index
    %c0_53 = arith.constant 0 : index
    %c0_54 = arith.constant 0 : index
    %c0_55 = arith.constant 0 : index
    %161 = vector.load %arg7[%c0_52, %c0_53, %c0_54, %c0_55] : memref<2x4x4x64xf32, #tpu.memory_space<vmem>>, vector<2x4x4x64xf32>
    tpu.vector_store %arg7[%c0_52, %c0_53, %c0_54, %c0_55], %119 {strides = array<i32>} : memref<2x4x4x64xf32, #tpu.memory_space<vmem>>, vector<2x4x4x64xf32>,
    return
  }
}

</mosaic_0001>

<llo_original>
// kernel: gnn_forward.1
$region0: #{gnn_forward.1}
  #allocation0 [shape = 'u32[]', space=smem, size = 0x4, offset = 0x4, fixed_abs, tag = 'smem constant byte address 0x4 - core index']
  #allocation1 [shape = 'u32[144,128]{1,0:T(1,128)}', space=vmem, size = 0x12000, scoped, tag = 'internal scratch']
  %s0 = inlined_call_operand.vmem [shape: f32[2,4,64], index: 0, kind: input, shape index: {}]
  %s1 = inlined_call_operand.vmem [shape: f32[2,4,4,64], index: 1, kind: input, shape index: {}, may-alias: {1,7}]
  %s2 = inlined_call_operand.vmem [shape: f32[64,256], index: 2, kind: input, shape index: {}]
  %s3 = inlined_call_operand.vmem [shape: f32[64,64], index: 3, kind: input, shape index: {}]
  %s4 = inlined_call_operand.vmem [shape: f32[64,256], index: 4, kind: input, shape index: {}]
  %s5 = inlined_call_operand.vmem [shape: f32[64,64], index: 5, kind: input, shape index: {}]
  %s6 = inlined_call_operand.hbm [shape: f32[2,4,64], index: 6, kind: output, shape index: {0}]
  %s7 = inlined_call_operand.vmem [shape: f32[2,4,4,64], index: 7, kind: output, shape index: {1}, may-alias: {1,7}]
  %8 = xla_tuple %s6, %s7
  %s9 = sld [smem:[#allocation0]]
  $region42: #{gnn_forward.1} parent=0
    _
  %s11 = ssub.s32 1, %s9
  %s12 = scalar_select 0, %s11, %s9
  $region1: #{gnn_forward.1} parent=0
    #allocation2 [shape = 'u8[4096]{0}', space=vmem, size = 0x1000, scoped, tag = 'output window, operand 0, single buffered']
    #allocation3 [shape = 's32[1]{0}', space=sflag, size = 0x4, scoped, tag = 'scoped memory for gnn_forward.1']
    %13 = vsyncpa [#allocation3], 0
    // Predicated region
    $region2: #{gnn_forward.1} parent=1 // pred_check
      _
    $region3: #{gnn_forward.1} parent=1 // pred_check_branch
      %15 = sbr.rel (0) target = $region5
    $region4: #{gnn_forward.1} parent=1 // pred_region
      _
    $region5: #{gnn_forward.1} parent=1 // pred_fallthru
      _
    // Predicated region
    $region6: #{gnn_forward.1} parent=1 // pred_check
      _
    $region7: #{gnn_forward.1} parent=1 // pred_check_branch
      %17 = sbr.rel (0) target = $region9
    $region8: #{gnn_forward.1} parent=1 // pred_region
      _
    $region9: #{gnn_forward.1} parent=1 // pred_fallthru
      _
    // Predicated region
    $region10: #{gnn_forward.1} parent=1 // pred_check
      _
    $region11: #{gnn_forward.1} parent=1 // pred_check_branch
      %19 = sbr.rel (0) target = $region13
    $region12: #{gnn_forward.1} parent=1 // pred_region
      _
    $region13: #{gnn_forward.1} parent=1 // pred_fallthru
      _
    // Predicated region
    $region14: #{gnn_forward.1} parent=1 // pred_check
      _
    $region15: #{gnn_forward.1} parent=1 // pred_check_branch
      %21 = sbr.rel (0) target = $region17
    $region16: #{gnn_forward.1} parent=1 // pred_region
      _
    $region17: #{gnn_forward.1} parent=1 // pred_fallthru
      _
    // Predicated region
    $region18: #{gnn_forward.1} parent=1 // pred_check
      _
    $region19: #{gnn_forward.1} parent=1 // pred_check_branch
      %23 = sbr.rel (0) target = $region21
    $region20: #{gnn_forward.1} parent=1 // pred_region
      _
    $region21: #{gnn_forward.1} parent=1 // pred_fallthru
      _
    // Predicated region
    $region22: #{gnn_forward.1} parent=1 // pred_check
      _
    $region23: #{gnn_forward.1} parent=1 // pred_check_branch
      %25 = sbr.rel (0) target = $region25
    $region24: #{gnn_forward.1} parent=1 // pred_region
      _
    $region25: #{gnn_forward.1} parent=1 // pred_fallthru
      _
    %v26 = vld [vmem:[%s0] sm:$0xf]
    %v27 = vld [vmem:[%s0 + $0x4] sm:$0xf]
    %v28 = vld [vmem:[%s1] sm:$0xf]
    %v29 = vld [vmem:[%s1 + $0x4] sm:$0xf]
    %v30 = vld [vmem:[%s1 + $0x8] sm:$0xf]
    %v31 = vld [vmem:[%s1 + $0xc] sm:$0xf]
    %v32 = vld [vmem:[%s1 + $0x10] sm:$0xf]
    %v33 = vld [vmem:[%s1 + $0x14] sm:$0xf]
    %v34 = vld [vmem:[%s1 + $0x18] sm:$0xf]
    %v35 = vld [vmem:[%s1 + $0x1c] sm:$0xf]
    %v36 = vld [vmem:[%s2] sm:$0xff]
    %v37 = vld [vmem:[%s2 + $0x8] sm:$0xff]
    %v38 = vld [vmem:[%s2 + $0x10] sm:$0xff]
    %v39 = vld [vmem:[%s2 + $0x18] sm:$0xff]
    %v40 = vld [vmem:[%s2 + $0x20] sm:$0xff]
    %v41 = vld [vmem:[%s2 + $0x28] sm:$0xff]
    %v42 = vld [vmem:[%s2 + $0x30] sm:$0xff]
    %v43 = vld [vmem:[%s2 + $0x38] sm:$0xff]
    %v44 = vld [vmem:[%s2 + $0x40] sm:$0xff]
    %v45 = vld [vmem:[%s2 + $0x48] sm:$0xff]
    %v46 = vld [vmem:[%s2 + $0x50] sm:$0xff]
    %v47 = vld [vmem:[%s2 + $0x58] sm:$0xff]
    %v48 = vld [vmem:[%s2 + $0x60] sm:$0xff]
    %v49 = vld [vmem:[%s2 + $0x68] sm:$0xff]
    %v50 = vld [vmem:[%s2 + $0x70] sm:$0xff]
    %v51 = vld [vmem:[%s2 + $0x78] sm:$0xff]
    %v54 = vcombine.low %v26, %v27
    %vm55 = vcmask 523264
    %v56 = vsel %vm55, %v54, 0
    %58 = vmatprep.subr.mxu0 %v37
    %59 = vmatpush1.msra.mxu0 %v36
    %60 = vmatprep.subr.mxu0 %v39
    %61 = vmatpush1.msra.mxu0 %v38
    %62 = vmatprep.subr.mxu0 %v41
    %63 = vmatpush1.msra.mxu0 %v40
    %64 = vmatprep.subr.mxu0 %v43
    %65 = vmatpush1.msra.mxu0 %v42
    %66 = vmatprep.subr.mxu0 %v45
    %67 = vmatpush1.msra.mxu0 %v44
    %68 = vmatprep.subr.mxu0 %v47
    %69 = vmatpush1.msra.mxu0 %v46
    %70 = vmatprep.subr.mxu0 %v49
    %71 = vmatpush1.msra.mxu0 %v48
    %72 = vmatprep.subr.mxu0 %v51
    %73 = vmatpush1.msra.mxu0 %v50
    %74 = vmatprep.subr.mxu0 0.0
    %75 = vmatpush1.msra.mxu0 0.0
    %76 = vmatprep.subr.mxu0 0.0
    %77 = vmatpush1.msra.mxu0 0.0
    %78 = vmatprep.subr.mxu0 0.0
    %79 = vmatpush1.msra.mxu0 0.0
    %80 = vmatprep.subr.mxu0 0.0
    %81 = vmatpush1.msra.mxu0 0.0
    %82 = vmatprep.subr.mxu0 0.0
    %83 = vmatpush1.msra.mxu0 0.0
    %84 = vmatprep.subr.mxu0 0.0
    %85 = vmatpush1.msra.mxu0 0.0
    %86 = vmatprep.subr.mxu0 0.0
    %87 = vmatpush1.msra.mxu0 0.0
    %88 = vmatprep.subr.mxu0 0.0
    %89 = vmatpush1.msra.mxu0 0.0
    %90 = vmatprep.subr.mxu0 0.0
    %91 = vmatpush1.msra.mxu0 0.0
    %92 = vmatprep.subr.mxu0 0.0
    %93 = vmatpush1.msra.mxu0 0.0
    %94 = vmatprep.subr.mxu0 0.0
    %95 = vmatpush1.msra.mxu0 0.0
    %96 = vmatprep.subr.mxu0 0.0
    %97 = vmatpush1.msra.mxu0 0.0
    %98 = vmatprep.subr.mxu0 0.0
    %99 = vmatpush1.msra.mxu0 0.0
    %100 = vmatprep.subr.mxu0 0.0
    %101 = vmatpush1.msra.mxu0 0.0
    %102 = vmatprep.subr.mxu0 0.0
    %103 = vmatpush1.msra.mxu0 0.0
    %104 = vmatprep.subr.mxu0 0.0
    %105 = vmatpush1.msra.mxu0 0.0
    %106 = vmatprep.subr.mxu0 0.0
    %107 = vmatpush1.msra.mxu0 0.0
    %108 = vmatprep.subr.mxu0 0.0
    %109 = vmatpush1.msra.mxu0 0.0
    %110 = vmatprep.subr.mxu0 0.0
    %111 = vmatpush1.msra.mxu0 0.0
    %112 = vmatprep.subr.mxu0 0.0
    %113 = vmatpush1.msra.mxu0 0.0
    %114 = vmatprep.subr.mxu0 0.0
    %115 = vmatpush1.msra.mxu0 0.0
    %116 = vmatprep.subr.mxu0 0.0
    %117 = vmatpush1.msra.mxu0 0.0
    %118 = vmatprep.subr.mxu0 0.0
    %119 = vmatpush1.msra.mxu0 0.0
    %120 = vmatprep.subr.mxu0 0.0
    %121 = vmatpush1.msra.mxu0 0.0
    %122 = vmatprep.mubr.f32.mxu0 0.0
    %123 = vmatmul.mubr.f32.gmra.mrb[0].mxu0 %v56
    %v124 = vpop.f32.mrb[0].mxu0
    %v125 = vadd.f32 0.0, %v124
    %v126 = vpop.f32.mrb[0].mxu0
    %v127 = vadd.f32 0.0, %v126
    %128 = vdwg.mxu0
    %v131 = vcombine.low %v125, %v127
    %v132 = vcombine.high %v125, %v127
    %v133 = vld [vmem:[%s3] sm:$0xff]
    %v134 = vld [vmem:[%s3 + $0x8] sm:$0xff]
    %v135 = vld [vmem:[%s3 + $0x10] sm:$0xff]
    %v136 = vld [vmem:[%s3 + $0x18] sm:$0xff]
    %v137 = vld [vmem:[%s3 + $0x20] sm:$0xff]
    %v138 = vld [vmem:[%s3 + $0x28] sm:$0xff]
    %v139 = vld [vmem:[%s3 + $0x30] sm:$0xff]
    %v140 = vld [vmem:[%s3 + $0x38] sm:$0xff]
    %v149 = vcombine.low %v28, %v29
    %v150 = vcombine.low %v30, %v31
    %v151 = vcombine.low %v32, %v33
    %v152 = vcombine.low %v34, %v35
    %v153 = vsel %vm55, %v149, 0
    %v155 = vsel %vm55, %v150, 0
    %v157 = vsel %vm55, %v151, 0
    %v159 = vsel %vm55, %v152, 0
    %161 = vmatprep.subr.mxu0 0.0
    %162 = vmatpush1.msra.mxu0 %v133
    %163 = vmatprep.subr.mxu0 0.0
    %164 = vmatpush1.msra.mxu0 %v134
    %165 = vmatprep.subr.mxu0 0.0
    %166 = vmatpush1.msra.mxu0 %v135
    %167 = vmatprep.subr.mxu0 0.0
    %168 = vmatpush1.msra.mxu0 %v136
    %169 = vmatprep.subr.mxu0 0.0
    %170 = vmatpush1.msra.mxu0 %v137
    %171 = vmatprep.subr.mxu0 0.0
    %172 = vmatpush1.msra.mxu0 %v138
    %173 = vmatprep.subr.mxu0 0.0
    %174 = vmatpush1.msra.mxu0 %v139
    %175 = vmatprep.subr.mxu0 0.0
    %176 = vmatpush1.msra.mxu0 %v140
    %177 = vmatprep.subr.mxu0 0.0
    %178 = vmatpush1.msra.mxu0 0.0
    %179 = vmatprep.subr.mxu0 0.0
    %180 = vmatpush1.msra.mxu0 0.0
    %181 = vmatprep.subr.mxu0 0.0
    %182 = vmatpush1.msra.mxu0 0.0
    %183 = vmatprep.subr.mxu0 0.0
    %184 = vmatpush1.msra.mxu0 0.0
    %185 = vmatprep.subr.mxu0 0.0
    %186 = vmatpush1.msra.mxu0 0.0
    %187 = vmatprep.subr.mxu0 0.0
    %188 = vmatpush1.msra.mxu0 0.0
    %189 = vmatprep.subr.mxu0 0.0
    %190 = vmatpush1.msra.mxu0 0.0
    %191 = vmatprep.subr.mxu0 0.0
    %192 = vmatpush1.msra.mxu0 0.0
    %193 = vmatprep.subr.mxu0 0.0
    %194 = vmatpush1.msra.mxu0 0.0
    %195 = vmatprep.subr.mxu0 0.0
    %196 = vmatpush1.msra.mxu0 0.0
    %197 = vmatprep.subr.mxu0 0.0
    %198 = vmatpush1.msra.mxu0 0.0
    %199 = vmatprep.subr.mxu0 0.0
    %200 = vmatpush1.msra.mxu0 0.0
    %201 = vmatprep.subr.mxu0 0.0
    %202 = vmatpush1.msra.mxu0 0.0
    %203 = vmatprep.subr.mxu0 0.0
    %204 = vmatpush1.msra.mxu0 0.0
    %205 = vmatprep.subr.mxu0 0.0
    %206 = vmatpush1.msra.mxu0 0.0
    %207 = vmatprep.subr.mxu0 0.0
    %208 = vmatpush1.msra.mxu0 0.0
    %209 = vmatprep.subr.mxu0 0.0
    %210 = vmatpush1.msra.mxu0 0.0
    %211 = vmatprep.subr.mxu0 0.0
    %212 = vmatpush1.msra.mxu0 0.0
    %213 = vmatprep.subr.mxu0 0.0
    %214 = vmatpush1.msra.mxu0 0.0
    %215 = vmatprep.subr.mxu0 0.0
    %216 = vmatpush1.msra.mxu0 0.0
    %217 = vmatprep.subr.mxu0 0.0
    %218 = vmatpush1.msra.mxu0 0.0
    %219 = vmatprep.subr.mxu0 0.0
    %220 = vmatpush1.msra.mxu0 0.0
    %221 = vmatprep.subr.mxu0 0.0
    %222 = vmatpush1.msra.mxu0 0.0
    %223 = vmatprep.subr.mxu0 0.0
    %224 = vmatpush1.msra.mxu0 0.0
    %225 = vmatprep.mubr.f32.mxu0 0.0
    %226 = vmatmul.mubr.f32.gmra.mrb[0].mxu0 %v153
    %v227 = vpop.f32.mrb[0].mxu0
    %v228 = vadd.f32 0.0, %v227
    %v229 = vpop.f32.mrb[0].mxu0
    %230 = vmatprep.mubr.f32.mxu0 0.0
    %231 = vmatmul.mubr.f32.gmra.mrb[0].mxu0 %v155
    %v232 = vpop.f32.mrb[0].mxu0
    %v233 = vadd.f32 0.0, %v232
    %v234 = vpop.f32.mrb[0].mxu0
    %235 = vmatprep.mubr.f32.mxu0 0.0
    %236 = vmatmul.mubr.f32.gmra.mrb[0].mxu0 %v157
    %v237 = vpop.f32.mrb[0].mxu0
    %v238 = vadd.f32 0.0, %v237
    %v239 = vpop.f32.mrb[0].mxu0
    %240 = vmatprep.mubr.f32.mxu0 0.0
    %241 = vmatmul.mubr.f32.gmra.mrb[0].mxu0 %v159
    %v242 = vpop.f32.mrb[0].mxu0
    %v243 = vadd.f32 0.0, %v242
    %v244 = vpop.f32.mrb[0].mxu0
    %245 = vdwg.mxu0
    %v250 = vcombine.high %v228, %v228
    %v251 = vcombine.high %v233, %v233
    %v252 = vcombine.high %v238, %v238
    %v253 = vcombine.high %v243, %v243
    %v259 = vunpack.c.l.s4 1966171168
    %v260 = vunpack.c.0.s8 %v259
    %v261 = vlaneseq
    %v262 = vshrl.u32 %v261, 7
    %v263 = vsub.s32 %v260, %v262
    %v264 = vrot.slane %v131, %v263
    %v265 = vcombine.high %v264, %v264
    %v267 = vunpack.c.l.s4 1966171168
    %v268 = vunpack.c.0.s8 %v267
    %v269 = vlaneseq
    %v270 = vshrl.u32 %v269, 7
    %v271 = vsub.s32 %v268, %v270
    %v272 = vrot.slane %v264, %v271
    %v274 = vunpack.c.l.s4 1966171168
    %v275 = vunpack.c.0.s8 %v274
    %v276 = vlaneseq
    %v277 = vshrl.u32 %v276, 7
    %v278 = vsub.s32 %v275, %v277
    %v279 = vrot.slane %v265, %v278
    %v280 = vcombine.high %v272, %v272
    %v281 = vcombine.high %v279, %v279
    %v283 = vunpack.c.l.s4 1966171168
    %v284 = vunpack.c.0.s8 %v283
    %v285 = vlaneseq
    %v286 = vshrl.u32 %v285, 7
    %v287 = vsub.s32 %v284, %v286
    %v288 = vrot.slane %v132, %v287
    %v289 = vcombine.high %v288, %v288
    %v291 = vunpack.c.l.s4 1966171168
    %v292 = vunpack.c.0.s8 %v291
    %v293 = vlaneseq
    %v294 = vshrl.u32 %v293, 7
    %v295 = vsub.s32 %v292, %v294
    %v296 = vrot.slane %v288, %v295
    %v298 = vunpack.c.l.s4 1966171168
    %v299 = vunpack.c.0.s8 %v298
    %v300 = vlaneseq
    %v301 = vshrl.u32 %v300, 7
    %v302 = vsub.s32 %v299, %v301
    %v303 = vrot.slane %v289, %v302
    %v304 = vcombine.high %v296, %v296
    %v305 = vcombine.high %v303, %v303
    %v306 = vlaneseq
    %v307 = vshrl.u32 %v306, 7
    %v308 = vsub.s32 0, %v307
    %v309 = vrot.slane %v272, %v308
    %v310 = vlaneseq
    %v311 = vshrl.u32 %v310, 7
    %v312 = vsub.s32 0, %v311
    %v313 = vrot.slane %v279, %v312
    %v314 = vlaneseq
    %v315 = vshrl.u32 %v314, 7
    %v316 = vsub.s32 0, %v315
    %v317 = vrot.slane %v280, %v316
    %v318 = vlaneseq
    %v319 = vshrl.u32 %v318, 7
    %v320 = vsub.s32 0, %v319
    %v321 = vrot.slane %v281, %v320
    %v322 = vlaneseq
    %v323 = vshrl.u32 %v322, 7
    %v324 = vsub.s32 0, %v323
    %v325 = vrot.slane %v296, %v324
    %v326 = vlaneseq
    %v327 = vshrl.u32 %v326, 7
    %v328 = vsub.s32 0, %v327
    %v329 = vrot.slane %v303, %v328
    %v330 = vlaneseq
    %v331 = vshrl.u32 %v330, 7
    %v332 = vsub.s32 0, %v331
    %v333 = vrot.slane %v304, %v332
    %v334 = vlaneseq
    %v335 = vshrl.u32 %v334, 7
    %v336 = vsub.s32 0, %v335
    %v337 = vrot.slane %v305, %v336
    %346 = vrot.lane.b32.xlu0 %v131, 64
    %v347 = vpop.permute.xlu0 %346
    %348 = vrot.lane.b32.xlu0 %v132, 64
    %v349 = vpop.permute.xlu0 %348
    %v352 = vadd.f32 %v309, %v347
    %v353 = vadd.f32 %v313, %v347
    %v354 = vadd.f32 %v317, %v347
    %v355 = vadd.f32 %v321, %v347
    %v356 = vadd.f32 %v325, %v349
    %v357 = vadd.f32 %v329, %v349
    %v358 = vadd.f32 %v333, %v349
    %v359 = vadd.f32 %v337, %v349
    %v360 = vadd.f32 %v352, %v228
    %v361 = vadd.f32 %v353, %v250
    %v362 = vadd.f32 %v354, %v233
    %v363 = vadd.f32 %v355, %v251
    %v364 = vadd.f32 %v356, %v238
    %v365 = vadd.f32 %v357, %v252
    %v366 = vadd.f32 %v358, %v243
    %v367 = vadd.f32 %v359, %v253
    %vm368 = vcmask 519168
    %v369 = vsel %vm368, %v360, 0.0
    %v370 = vsel %vm368, %v364, 0.0
    %v371 = vadd.f32 %v369, %v370
    %372 = vadd.xlane.f32.xlu0 %v371
    %v373 = vpop.xlane.xlu0 %372
    %v374 = vsel %vm368, %v361, 0.0
    %v375 = vsel %vm368, %v365, 0.0
    %v376 = vadd.f32 %v374, %v375
    %377 = vadd.xlane.f32.xlu0 %v376
    %v378 = vpop.xlane.xlu0 %377
    %v379 = vsel %vm368, %v362, 0.0
    %v380 = vsel %vm368, %v366, 0.0
    %v381 = vadd.f32 %v379, %v380
    %382 = vadd.xlane.f32.xlu0 %v381
    %v383 = vpop.xlane.xlu0 %382
    %v384 = vsel %vm368, %v363, 0.0
    %v385 = vsel %vm368, %v367, 0.0
    %v386 = vadd.f32 %v384, %v385
    %387 = vadd.xlane.f32.xlu0 %v386
    %v388 = vpop.xlane.xlu0 %387
    %v389 = vrcp.pop 128.0
    %v390 = vmul.f32 %v373, %v389
    %v391 = vmul.f32 %v378, %v389
    %v392 = vmul.f32 %v383, %v389
    %v393 = vmul.f32 %v388, %v389
    %v394 = vsub.f32 %v360, %v390
    %v395 = vsub.f32 %v361, %v391
    %v396 = vsub.f32 %v362, %v392
    %v397 = vsub.f32 %v363, %v393
    %v398 = vsub.f32 %v364, %v390
    %v399 = vsub.f32 %v365, %v391
    %v400 = vsub.f32 %v366, %v392
    %v401 = vsub.f32 %v367, %v393
    %v402 = vmul.f32 %v394, %v394
    %v403 = vmul.f32 %v395, %v395
    %v404 = vmul.f32 %v396, %v396
    %v405 = vmul.f32 %v397, %v397
    %v406 = vmul.f32 %v398, %v398
    %v407 = vmul.f32 %v399, %v399
    %v408 = vmul.f32 %v400, %v400
    %v409 = vmul.f32 %v401, %v401
    %v410 = vsel %vm368, %v402, 0.0
    %v411 = vsel %vm368, %v406, 0.0
    %v412 = vadd.f32 %v410, %v411
    %413 = vadd.xlane.f32.xlu0 %v412
    %v414 = vpop.xlane.xlu0 %413
    %v415 = vsel %vm368, %v403, 0.0
    %v416 = vsel %vm368, %v407, 0.0
    %v417 = vadd.f32 %v415, %v416
    %418 = vadd.xlane.f32.xlu0 %v417
    %v419 = vpop.xlane.xlu0 %418
    %v420 = vsel %vm368, %v404, 0.0
    %v421 = vsel %vm368, %v408, 0.0
    %v422 = vadd.f32 %v420, %v421
    %423 = vadd.xlane.f32.xlu0 %v422
    %v424 = vpop.xlane.xlu0 %423
    %v425 = vsel %vm368, %v405, 0.0
    %v426 = vsel %vm368, %v409, 0.0
    %v427 = vadd.f32 %v425, %v426
    %428 = vadd.xlane.f32.xlu0 %v427
    %v429 = vpop.xlane.xlu0 %428
    %v430 = vmul.f32 %v414, %v389
    %v431 = vmul.f32 %v419, %v389
    %v432 = vmul.f32 %v424, %v389
    %v433 = vmul.f32 %v429, %v389
    %v434 = vadd.f32 %v430, 1e-05
    %v435 = vadd.f32 %v431, 1e-05
    %v436 = vadd.f32 %v432, 1e-05
    %v437 = vadd.f32 %v433, 1e-05
    %v438 = vrsqrt.pop %v434
    %v439 = vrsqrt.pop %v435
    %v440 = vrsqrt.pop %v436
    %v441 = vrsqrt.pop %v437
    %v442 = vmul.f32 %v394, %v438
    %v443 = vmul.f32 %v395, %v439
    %v444 = vmul.f32 %v396, %v440
    %v445 = vmul.f32 %v397, %v441
    %v446 = vmul.f32 %v398, %v438
    %v447 = vmul.f32 %v399, %v439
    %v448 = vmul.f32 %v400, %v440
    %v449 = vmul.f32 %v401, %v441
    %v450 = vmax.f32 %v442, 0.0
    %v451 = vmax.f32 %v443, 0.0
    %v452 = vmax.f32 %v444, 0.0
    %v453 = vmax.f32 %v445, 0.0
    %v454 = vmax.f32 %v446, 0.0
    %v455 = vmax.f32 %v447, 0.0
    %v456 = vmax.f32 %v448, 0.0
    %v457 = vmax.f32 %v449, 0.0
    %v458 = vadd.f32 %v28, %v450
    %v459 = vadd.f32 %v29, %v451
    %v460 = vadd.f32 %v30, %v452
    %v461 = vadd.f32 %v31, %v453
    %v462 = vadd.f32 %v32, %v454
    %v463 = vadd.f32 %v33, %v455
    %v464 = vadd.f32 %v34, %v456
    %v465 = vadd.f32 %v35, %v457
    %v466 = vxor.u32 %v458, 2147483648
    %v467 = vxor.u32 %v459, 2147483648
    %v468 = vxor.u32 %v460, 2147483648
    %v469 = vxor.u32 %v461, 2147483648
    %v470 = vxor.u32 %v462, 2147483648
    %v471 = vxor.u32 %v463, 2147483648
    %v472 = vxor.u32 %v464, 2147483648
    %v473 = vxor.u32 %v465, 2147483648
    %v474 = vmul.f32 %v466, 1.442695
    %v475 = vpow.pop %v474
    %v476 = vmul.f32 %v467, 1.442695
    %v477 = vpow.pop %v476
    %v478 = vmul.f32 %v468, 1.442695
    %v479 = vpow.pop %v478
    %v480 = vmul.f32 %v469, 1.442695
    %v481 = vpow.pop %v480
    %v482 = vmul.f32 %v470, 1.442695
    %v483 = vpow.pop %v482
    %v484 = vmul.f32 %v471, 1.442695
    %v485 = vpow.pop %v484
    %v486 = vmul.f32 %v472, 1.442695
    %v487 = vpow.pop %v486
    %v488 = vmul.f32 %v473, 1.442695
    %v489 = vpow.pop %v488
    %v490 = vadd.f32 %v475, 1.0
    %v491 = vadd.f32 %v477, 1.0
    %v492 = vadd.f32 %v479, 1.0
    %v493 = vadd.f32 %v481, 1.0
    %v494 = vadd.f32 %v483, 1.0
    %v495 = vadd.f32 %v485, 1.0
    %v496 = vadd.f32 %v487, 1.0
    %v497 = vadd.f32 %v489, 1.0
    %v498 = vrcp.pop %v490
    %v499 = vmul.f32 1.0, %v498
    %v500 = vrcp.pop %v491
    %v501 = vmul.f32 1.0, %v500
    %v502 = vrcp.pop %v492
    %v503 = vmul.f32 1.0, %v502
    %v504 = vrcp.pop %v493
    %v505 = vmul.f32 1.0, %v504
    %v506 = vrcp.pop %v494
    %v507 = vmul.f32 1.0, %v506
    %v508 = vrcp.pop %v495
    %v509 = vmul.f32 1.0, %v508
    %v510 = vrcp.pop %v496
    %v511 = vmul.f32 1.0, %v510
    %v512 = vrcp.pop %v497
    %v513 = vmul.f32 1.0, %v512
    %v514 = vsel %vm368, %v499, -inf
    %v515 = vrot.slane %v514, 4
    %v516 = vmax.f32 %v514, %v515
    %v517 = vrot.slane %v516, 2
    %v518 = vmax.f32 %v516, %v517
    %v519 = vrot.slane %v518, 1
    %v520 = vmax.f32 %v518, %v519
    %v521 = vsel %vm368, %v501, -inf
    %v522 = vrot.slane %v521, 4
    %v523 = vmax.f32 %v521, %v522
    %v524 = vrot.slane %v523, 2
    %v525 = vmax.f32 %v523, %v524
    %v526 = vrot.slane %v525, 1
    %v527 = vmax.f32 %v525, %v526
    %v528 = vsel %vm368, %v503, -inf
    %v529 = vrot.slane %v528, 4
    %v530 = vmax.f32 %v528, %v529
    %v531 = vrot.slane %v530, 2
    %v532 = vmax.f32 %v530, %v531
    %v533 = vrot.slane %v532, 1
    %v534 = vmax.f32 %v532, %v533
    %v535 = vsel %vm368, %v505, -inf
    %v536 = vrot.slane %v535, 4
    %v537 = vmax.f32 %v535, %v536
    %v538 = vrot.slane %v537, 2
    %v539 = vmax.f32 %v537, %v538
    %v540 = vrot.slane %v539, 1
    %v541 = vmax.f32 %v539, %v540
    %v542 = vsel %vm368, %v507, -inf
    %v543 = vrot.slane %v542, 4
    %v544 = vmax.f32 %v542, %v543
    %v545 = vrot.slane %v544, 2
    %v546 = vmax.f32 %v544, %v545
    %v547 = vrot.slane %v546, 1
    %v548 = vmax.f32 %v546, %v547
    %v549 = vsel %vm368, %v509, -inf
    %v550 = vrot.slane %v549, 4
    %v551 = vmax.f32 %v549, %v550
    %v552 = vrot.slane %v551, 2
    %v553 = vmax.f32 %v551, %v552
    %v554 = vrot.slane %v553, 1
    %v555 = vmax.f32 %v553, %v554
    %v556 = vsel %vm368, %v511, -inf
    %v557 = vrot.slane %v556, 4
    %v558 = vmax.f32 %v556, %v557
    %v559 = vrot.slane %v558, 2
    %v560 = vmax.f32 %v558, %v559
    %v561 = vrot.slane %v560, 1
    %v562 = vmax.f32 %v560, %v561
    %v563 = vsel %vm368, %v513, -inf
    %v564 = vrot.slane %v563, 4
    %v565 = vmax.f32 %v563, %v564
    %v566 = vrot.slane %v565, 2
    %v567 = vmax.f32 %v565, %v566
    %v568 = vrot.slane %v567, 1
    %v569 = vmax.f32 %v567, %v568
    %v570 = vsub.f32 %v499, %v520
    %v571 = vsub.f32 %v501, %v527
    %v572 = vsub.f32 %v503, %v534
    %v573 = vsub.f32 %v505, %v541
    %v574 = vsub.f32 %v507, %v548
    %v575 = vsub.f32 %v509, %v555
    %v576 = vsub.f32 %v511, %v562
    %v577 = vsub.f32 %v513, %v569
    %v578 = vmul.f32 %v570, 1.442695
    %v579 = vpow.pop %v578
    %v580 = vmul.f32 %v571, 1.442695
    %v581 = vpow.pop %v580
    %v582 = vmul.f32 %v572, 1.442695
    %v583 = vpow.pop %v582
    %v584 = vmul.f32 %v573, 1.442695
    %v585 = vpow.pop %v584
    %v586 = vmul.f32 %v574, 1.442695
    %v587 = vpow.pop %v586
    %v588 = vmul.f32 %v575, 1.442695
    %v589 = vpow.pop %v588
    %v590 = vmul.f32 %v576, 1.442695
    %v591 = vpow.pop %v590
    %v592 = vmul.f32 %v577, 1.442695
    %v593 = vpow.pop %v592
    %v594 = vsel %vm368, %v579, 0.0
    %v595 = vrot.slane %v594, 4
    %v596 = vadd.f32 %v594, %v595
    %v597 = vrot.slane %v596, 2
    %v598 = vadd.f32 %v596, %v597
    %v599 = vrot.slane %v598, 1
    %v600 = vadd.f32 %v598, %v599
    %v601 = vsel %vm368, %v581, 0.0
    %v602 = vrot.slane %v601, 4
    %v603 = vadd.f32 %v601, %v602
    %v604 = vrot.slane %v603, 2
    %v605 = vadd.f32 %v603, %v604
    %v606 = vrot.slane %v605, 1
    %v607 = vadd.f32 %v605, %v606
    %v608 = vsel %vm368, %v583, 0.0
    %v609 = vrot.slane %v608, 4
    %v610 = vadd.f32 %v608, %v609
    %v611 = vrot.slane %v610, 2
    %v612 = vadd.f32 %v610, %v611
    %v613 = vrot.slane %v612, 1
    %v614 = vadd.f32 %v612, %v613
    %v615 = vsel %vm368, %v585, 0.0
    %v616 = vrot.slane %v615, 4
    %v617 = vadd.f32 %v615, %v616
    %v618 = vrot.slane %v617, 2
    %v619 = vadd.f32 %v617, %v618
    %v620 = vrot.slane %v619, 1
    %v621 = vadd.f32 %v619, %v620
    %v622 = vsel %vm368, %v587, 0.0
    %v623 = vrot.slane %v622, 4
    %v624 = vadd.f32 %v622, %v623
    %v625 = vrot.slane %v624, 2
    %v626 = vadd.f32 %v624, %v625
    %v627 = vrot.slane %v626, 1
    %v628 = vadd.f32 %v626, %v627
    %v629 = vsel %vm368, %v589, 0.0
    %v630 = vrot.slane %v629, 4
    %v631 = vadd.f32 %v629, %v630
    %v632 = vrot.slane %v631, 2
    %v633 = vadd.f32 %v631, %v632
    %v634 = vrot.slane %v633, 1
    %v635 = vadd.f32 %v633, %v634
    %v636 = vsel %vm368, %v591, 0.0
    %v637 = vrot.slane %v636, 4
    %v638 = vadd.f32 %v636, %v637
    %v639 = vrot.slane %v638, 2
    %v640 = vadd.f32 %v638, %v639
    %v641 = vrot.slane %v640, 1
    %v642 = vadd.f32 %v640, %v641
    %v643 = vsel %vm368, %v593, 0.0
    %v644 = vrot.slane %v643, 4
    %v645 = vadd.f32 %v643, %v644
    %v646 = vrot.slane %v645, 2
    %v647 = vadd.f32 %v645, %v646
    %v648 = vrot.slane %v647, 1
    %v649 = vadd.f32 %v647, %v648
    %v650 = vrcp.pop %v600
    %v651 = vmul.f32 %v579, %v650
    %v652 = vrcp.pop %v607
    %v653 = vmul.f32 %v581, %v652
    %v654 = vrcp.pop %v614
    %v655 = vmul.f32 %v583, %v654
    %v656 = vrcp.pop %v621
    %v657 = vmul.f32 %v585, %v656
    %v658 = vrcp.pop %v628
    %v659 = vmul.f32 %v587, %v658
    %v660 = vrcp.pop %v635
    %v661 = vmul.f32 %v589, %v660
    %v662 = vrcp.pop %v642
    %v663 = vmul.f32 %v591, %v662
    %v664 = vrcp.pop %v649
    %v665 = vmul.f32 %v593, %v664
    %v666 = vrot.slane %v347, 4
    %v667 = vrot.slane %v349, 4
    %v670 = vmul.f32 %v651, %v666
    %v671 = vmul.f32 %v653, %v666
    %v672 = vmul.f32 %v655, %v666
    %v673 = vmul.f32 %v657, %v666
    %v674 = vmul.f32 %v659, %v667
    %v675 = vmul.f32 %v661, %v667
    %v676 = vmul.f32 %v663, %v667
    %v677 = vmul.f32 %v665, %v667
    %v678 = vsel %vm368, %v670, 0.0
    %v679 = vrot.slane %v678, 4
    %v680 = vadd.f32 %v678, %v679
    %v681 = vrot.slane %v680, 2
    %v682 = vadd.f32 %v680, %v681
    %v683 = vrot.slane %v682, 1
    %v684 = vadd.f32 %v682, %v683
    %v685 = vsel %vm368, %v671, 0.0
    %v686 = vrot.slane %v685, 4
    %v687 = vadd.f32 %v685, %v686
    %v688 = vrot.slane %v687, 2
    %v689 = vadd.f32 %v687, %v688
    %v690 = vrot.slane %v689, 1
    %v691 = vadd.f32 %v689, %v690
    %v692 = vsel %vm368, %v672, 0.0
    %v693 = vrot.slane %v692, 4
    %v694 = vadd.f32 %v692, %v693
    %v695 = vrot.slane %v694, 2
    %v696 = vadd.f32 %v694, %v695
    %v697 = vrot.slane %v696, 1
    %v698 = vadd.f32 %v696, %v697
    %v699 = vsel %vm368, %v673, 0.0
    %v700 = vrot.slane %v699, 4
    %v701 = vadd.f32 %v699, %v700
    %v702 = vrot.slane %v701, 2
    %v703 = vadd.f32 %v701, %v702
    %v704 = vrot.slane %v703, 1
    %v705 = vadd.f32 %v703, %v704
    %v706 = vsel %vm368, %v674, 0.0
    %v707 = vrot.slane %v706, 4
    %v708 = vadd.f32 %v706, %v707
    %v709 = vrot.slane %v708, 2
    %v710 = vadd.f32 %v708, %v709
    %v711 = vrot.slane %v710, 1
    %v712 = vadd.f32 %v710, %v711
    %v713 = vsel %vm368, %v675, 0.0
    %v714 = vrot.slane %v713, 4
    %v715 = vadd.f32 %v713, %v714
    %v716 = vrot.slane %v715, 2
    %v717 = vadd.f32 %v715, %v716
    %v718 = vrot.slane %v717, 1
    %v719 = vadd.f32 %v717, %v718
    %v720 = vsel %vm368, %v676, 0.0
    %v721 = vrot.slane %v720, 4
    %v722 = vadd.f32 %v720, %v721
    %v723 = vrot.slane %v722, 2
    %v724 = vadd.f32 %v722, %v723
    %v725 = vrot.slane %v724, 1
    %v726 = vadd.f32 %v724, %v725
    %v727 = vsel %vm368, %v677, 0.0
    %v728 = vrot.slane %v727, 4
    %v729 = vadd.f32 %v727, %v728
    %v730 = vrot.slane %v729, 2
    %v731 = vadd.f32 %v729, %v730
    %v732 = vrot.slane %v731, 1
    %v733 = vadd.f32 %v731, %v732
    %v734 = vrot.slane %v131, 4
    %v735 = vrot.slane %v132, 4
    %v746 = vrot.slane %v691, 7
    %vm747 = vcmask 1041409
    %v748 = vsel %vm747, %v746, %v684
    %vm749 = vcmask 1045509
    %v750 = vsel %vm749, %v746, %v748
    %v751 = vrot.slane %v698, 6
    %vm752 = vcmask 1042434
    %v753 = vsel %vm752, %v751, %v750
    %vm754 = vcmask 1046534
    %v755 = vsel %vm754, %v751, %v753
    %v756 = vrot.slane %v705, 5
    %vm757 = vcmask 1043459
    %v758 = vsel %vm757, %v756, %v755
    %vm759 = vcmask 1047559
    %v760 = vsel %vm759, %v756, %v758
    %v761 = vrot.slane %v719, 7
    %v762 = vsel %vm747, %v761, %v712
    %v763 = vsel %vm749, %v761, %v762
    %v764 = vrot.slane %v726, 6
    %v765 = vsel %vm752, %v764, %v763
    %v766 = vsel %vm754, %v764, %v765
    %v767 = vrot.slane %v733, 5
    %v768 = vsel %vm757, %v767, %v766
    %v769 = vsel %vm759, %v767, %v768
    %v772 = vadd.f32 %v734, %v760
    %v773 = vadd.f32 %v735, %v769
    %v774 = vsel %vm368, %v772, 0.0
    %v775 = vsel %vm368, %v773, 0.0
    %v776 = vadd.f32 %v774, %v775
    %777 = vadd.xlane.f32.xlu0 %v776
    %v778 = vpop.xlane.xlu0 %777
    %v779 = vmul.f32 %v778, %v389
    %v780 = vsub.f32 %v772, %v779
    %v781 = vsub.f32 %v773, %v779
    %v782 = vmul.f32 %v780, %v780
    %v783 = vmul.f32 %v781, %v781
    %v784 = vsel %vm368, %v782, 0.0
    %v785 = vsel %vm368, %v783, 0.0
    %v786 = vadd.f32 %v784, %v785
    %787 = vadd.xlane.f32.xlu0 %v786
    %v788 = vpop.xlane.xlu0 %787
    %v789 = vmul.f32 %v788, %v389
    %v790 = vadd.f32 %v789, 1e-05
    %v791 = vrsqrt.pop %v790
    %v792 = vmul.f32 %v780, %v791
    %v793 = vmul.f32 %v781, %v791
    %v794 = vadd.f32 %v26, %v792
    %v795 = vadd.f32 %v27, %v793
    %v796 = vmax.f32 %v794, 0.0
    %v797 = vmax.f32 %v795, 0.0
    %v798 = vld [vmem:[%s4] sm:$0xff]
    %v799 = vld [vmem:[%s4 + $0x8] sm:$0xff]
    %v800 = vld [vmem:[%s4 + $0x10] sm:$0xff]
    %v801 = vld [vmem:[%s4 + $0x18] sm:$0xff]
    %v802 = vld [vmem:[%s4 + $0x20] sm:$0xff]
    %v803 = vld [vmem:[%s4 + $0x28] sm:$0xff]
    %v804 = vld [vmem:[%s4 + $0x30] sm:$0xff]
    %v805 = vld [vmem:[%s4 + $0x38] sm:$0xff]
    %v806 = vld [vmem:[%s4 + $0x40] sm:$0xff]
    %v807 = vld [vmem:[%s4 + $0x48] sm:$0xff]
    %v808 = vld [vmem:[%s4 + $0x50] sm:$0xff]
    %v809 = vld [vmem:[%s4 + $0x58] sm:$0xff]
    %v810 = vld [vmem:[%s4 + $0x60] sm:$0xff]
    %v811 = vld [vmem:[%s4 + $0x68] sm:$0xff]
    %v812 = vld [vmem:[%s4 + $0x70] sm:$0xff]
    %v813 = vld [vmem:[%s4 + $0x78] sm:$0xff]
    %v816 = vcombine.low %v796, %v797
    %v817 = vsel %vm55, %v816, 0
    %819 = vmatprep.subr.mxu0 %v799
    %820 = vmatpush1.msra.mxu0 %v798
    %821 = vmatprep.subr.mxu0 %v801
    %822 = vmatpush1.msra.mxu0 %v800
    %823 = vmatprep.subr.mxu0 %v803
    %824 = vmatpush1.msra.mxu0 %v802
    %825 = vmatprep.subr.mxu0 %v805
    %826 = vmatpush1.msra.mxu0 %v804
    %827 = vmatprep.subr.mxu0 %v807
    %828 = vmatpush1.msra.mxu0 %v806
    %829 = vmatprep.subr.mxu0 %v809
    %830 = vmatpush1.msra.mxu0 %v808
    %831 = vmatprep.subr.mxu0 %v811
    %832 = vmatpush1.msra.mxu0 %v810
    %833 = vmatprep.subr.mxu0 %v813
    %834 = vmatpush1.msra.mxu0 %v812
    %835 = vmatprep.subr.mxu0 0.0
    %836 = vmatpush1.msra.mxu0 0.0
    %837 = vmatprep.subr.mxu0 0.0
    %838 = vmatpush1.msra.mxu0 0.0
    %839 = vmatprep.subr.mxu0 0.0
    %840 = vmatpush1.msra.mxu0 0.0
    %841 = vmatprep.subr.mxu0 0.0
    %842 = vmatpush1.msra.mxu0 0.0
    %843 = vmatprep.subr.mxu0 0.0
    %844 = vmatpush1.msra.mxu0 0.0
    %845 = vmatprep.subr.mxu0 0.0
    %846 = vmatpush1.msra.mxu0 0.0
    %847 = vmatprep.subr.mxu0 0.0
    %848 = vmatpush1.msra.mxu0 0.0
    %849 = vmatprep.subr.mxu0 0.0
    %850 = vmatpush1.msra.mxu0 0.0
    %851 = vmatprep.subr.mxu0 0.0
    %852 = vmatpush1.msra.mxu0 0.0
    %853 = vmatprep.subr.mxu0 0.0
    %854 = vmatpush1.msra.mxu0 0.0
    %855 = vmatprep.subr.mxu0 0.0
    %856 = vmatpush1.msra.mxu0 0.0
    %857 = vmatprep.subr.mxu0 0.0
    %858 = vmatpush1.msra.mxu0 0.0
    %859 = vmatprep.subr.mxu0 0.0
    %860 = vmatpush1.msra.mxu0 0.0
    %861 = vmatprep.subr.mxu0 0.0
    %862 = vmatpush1.msra.mxu0 0.0
    %863 = vmatprep.subr.mxu0 0.0
    %864 = vmatpush1.msra.mxu0 0.0
    %865 = vmatprep.subr.mxu0 0.0
    %866 = vmatpush1.msra.mxu0 0.0
    %867 = vmatprep.subr.mxu0 0.0
    %868 = vmatpush1.msra.mxu0 0.0
    %869 = vmatprep.subr.mxu0 0.0
    %870 = vmatpush1.msra.mxu0 0.0
    %871 = vmatprep.subr.mxu0 0.0
    %872 = vmatpush1.msra.mxu0 0.0
    %873 = vmatprep.subr.mxu0 0.0
    %874 = vmatpush1.msra.mxu0 0.0
    %875 = vmatprep.subr.mxu0 0.0
    %876 = vmatpush1.msra.mxu0 0.0
    %877 = vmatprep.subr.mxu0 0.0
    %878 = vmatpush1.msra.mxu0 0.0
    %879 = vmatprep.subr.mxu0 0.0
    %880 = vmatpush1.msra.mxu0 0.0
    %881 = vmatprep.subr.mxu0 0.0
    %882 = vmatpush1.msra.mxu0 0.0
    %883 = vmatprep.mubr.f32.mxu0 0.0
    %884 = vmatmul.mubr.f32.gmra.mrb[0].mxu0 %v817
    %v885 = vpop.f32.mrb[0].mxu0
    %v886 = vadd.f32 0.0, %v885
    %v887 = vpop.f32.mrb[0].mxu0
    %v888 = vadd.f32 0.0, %v887
    %889 = vdwg.mxu0
    %v892 = vcombine.low %v886, %v888
    %v893 = vcombine.high %v886, %v888
    %v894 = vld [vmem:[%s5] sm:$0xff]
    %v895 = vld [vmem:[%s5 + $0x8] sm:$0xff]
    %v896 = vld [vmem:[%s5 + $0x10] sm:$0xff]
    %v897 = vld [vmem:[%s5 + $0x18] sm:$0xff]
    %v898 = vld [vmem:[%s5 + $0x20] sm:$0xff]
    %v899 = vld [vmem:[%s5 + $0x28] sm:$0xff]
    %v900 = vld [vmem:[%s5 + $0x30] sm:$0xff]
    %v901 = vld [vmem:[%s5 + $0x38] sm:$0xff]
    %v910 = vcombine.low %v458, %v459
    %v911 = vcombine.low %v460, %v461
    %v912 = vcombine.low %v462, %v463
    %v913 = vcombine.low %v464, %v465
    %v914 = vsel %vm55, %v910, 0
    %v916 = vsel %vm55, %v911, 0
    %v918 = vsel %vm55, %v912, 0
    %v920 = vsel %vm55, %v913, 0
    %922 = vmatprep.subr.mxu0 0.0
    %923 = vmatpush1.msra.mxu0 %v894
    %924 = vmatprep.subr.mxu0 0.0
    %925 = vmatpush1.msra.mxu0 %v895
    %926 = vmatprep.subr.mxu0 0.0
    %927 = vmatpush1.msra.mxu0 %v896
    %928 = vmatprep.subr.mxu0 0.0
    %929 = vmatpush1.msra.mxu0 %v897
    %930 = vmatprep.subr.mxu0 0.0
    %931 = vmatpush1.msra.mxu0 %v898
    %932 = vmatprep.subr.mxu0 0.0
    %933 = vmatpush1.msra.mxu0 %v899
    %934 = vmatprep.subr.mxu0 0.0
    %935 = vmatpush1.msra.mxu0 %v900
    %936 = vmatprep.subr.mxu0 0.0
    %937 = vmatpush1.msra.mxu0 %v901
    %938 = vmatprep.subr.mxu0 0.0
    %939 = vmatpush1.msra.mxu0 0.0
    %940 = vmatprep.subr.mxu0 0.0
    %941 = vmatpush1.msra.mxu0 0.0
    %942 = vmatprep.subr.mxu0 0.0
    %943 = vmatpush1.msra.mxu0 0.0
    %944 = vmatprep.subr.mxu0 0.0
    %945 = vmatpush1.msra.mxu0 0.0
    %946 = vmatprep.subr.mxu0 0.0
    %947 = vmatpush1.msra.mxu0 0.0
    %948 = vmatprep.subr.mxu0 0.0
    %949 = vmatpush1.msra.mxu0 0.0
    %950 = vmatprep.subr.mxu0 0.0
    %951 = vmatpush1.msra.mxu0 0.0
    %952 = vmatprep.subr.mxu0 0.0
    %953 = vmatpush1.msra.mxu0 0.0
    %954 = vmatprep.subr.mxu0 0.0
    %955 = vmatpush1.msra.mxu0 0.0
    %956 = vmatprep.subr.mxu0 0.0
    %957 = vmatpush1.msra.mxu0 0.0
    %958 = vmatprep.subr.mxu0 0.0
    %959 = vmatpush1.msra.mxu0 0.0
    %960 = vmatprep.subr.mxu0 0.0
    %961 = vmatpush1.msra.mxu0 0.0
    %962 = vmatprep.subr.mxu0 0.0
    %963 = vmatpush1.msra.mxu0 0.0
    %964 = vmatprep.subr.mxu0 0.0
    %965 = vmatpush1.msra.mxu0 0.0
    %966 = vmatprep.subr.mxu0 0.0
    %967 = vmatpush1.msra.mxu0 0.0
    %968 = vmatprep.subr.mxu0 0.0
    %969 = vmatpush1.msra.mxu0 0.0
    %970 = vmatprep.subr.mxu0 0.0
    %971 = vmatpush1.msra.mxu0 0.0
    %972 = vmatprep.subr.mxu0 0.0
    %973 = vmatpush1.msra.mxu0 0.0
    %974 = vmatprep.subr.mxu0 0.0
    %975 = vmatpush1.msra.mxu0 0.0
    %976 = vmatprep.subr.mxu0 0.0
    %977 = vmatpush1.msra.mxu0 0.0
    %978 = vmatprep.subr.mxu0 0.0
    %979 = vmatpush1.msra.mxu0 0.0
    %980 = vmatprep.subr.mxu0 0.0
    %981 = vmatpush1.msra.mxu0 0.0
    %982 = vmatprep.subr.mxu0 0.0
    %983 = vmatpush1.msra.mxu0 0.0
    %984 = vmatprep.subr.mxu0 0.0
    %985 = vmatpush1.msra.mxu0 0.0
    %986 = vmatprep.mubr.f32.mxu0 0.0
    %987 = vmatmul.mubr.f32.gmra.mrb[0].mxu0 %v914
    %v988 = vpop.f32.mrb[0].mxu0
    %v989 = vadd.f32 0.0, %v988
    %v990 = vpop.f32.mrb[0].mxu0
    %991 = vmatprep.mubr.f32.mxu0 0.0
    %992 = vmatmul.mubr.f32.gmra.mrb[0].mxu0 %v916
    %v993 = vpop.f32.mrb[0].mxu0
    %v994 = vadd.f32 0.0, %v993
    %v995 = vpop.f32.mrb[0].mxu0
    %996 = vmatprep.mubr.f32.mxu0 0.0
    %997 = vmatmul.mubr.f32.gmra.mrb[0].mxu0 %v918
    %v998 = vpop.f32.mrb[0].mxu0
    %v999 = vadd.f32 0.0, %v998
    %v1000 = vpop.f32.mrb[0].mxu0
    %1001 = vmatprep.mubr.f32.mxu0 0.0
    %1002 = vmatmul.mubr.f32.gmra.mrb[0].mxu0 %v920
    %v1003 = vpop.f32.mrb[0].mxu0
    %v1004 = vadd.f32 0.0, %v1003
    %v1005 = vpop.f32.mrb[0].mxu0
    %1006 = vdwg.mxu0
    %v1011 = vcombine.high %v989, %v989
    %v1012 = vcombine.high %v994, %v994
    %v1013 = vcombine.high %v999, %v999
    %v1014 = vcombine.high %v1004, %v1004
    %v1020 = vunpack.c.l.s4 1966171168
    %v1021 = vunpack.c.0.s8 %v1020
    %v1022 = vlaneseq
    %v1023 = vshrl.u32 %v1022, 7
    %v1024 = vsub.s32 %v1021, %v1023
    %v1025 = vrot.slane %v892, %v1024
    %v1026 = vcombine.high %v1025, %v1025
    %v1028 = vunpack.c.l.s4 1966171168
    %v1029 = vunpack.c.0.s8 %v1028
    %v1030 = vlaneseq
    %v1031 = vshrl.u32 %v1030, 7
    %v1032 = vsub.s32 %v1029, %v1031
    %v1033 = vrot.slane %v1025, %v1032
    %v1035 = vunpack.c.l.s4 1966171168
    %v1036 = vunpack.c.0.s8 %v1035
    %v1037 = vlaneseq
    %v1038 = vshrl.u32 %v1037, 7
    %v1039 = vsub.s32 %v1036, %v1038
    %v1040 = vrot.slane %v1026, %v1039
    %v1041 = vcombine.high %v1033, %v1033
    %v1042 = vcombine.high %v1040, %v1040
    %v1044 = vunpack.c.l.s4 1966171168
    %v1045 = vunpack.c.0.s8 %v1044
    %v1046 = vlaneseq
    %v1047 = vshrl.u32 %v1046, 7
    %v1048 = vsub.s32 %v1045, %v1047
    %v1049 = vrot.slane %v893, %v1048
    %v1050 = vcombine.high %v1049, %v1049
    %v1052 = vunpack.c.l.s4 1966171168
    %v1053 = vunpack.c.0.s8 %v1052
    %v1054 = vlaneseq
    %v1055 = vshrl.u32 %v1054, 7
    %v1056 = vsub.s32 %v1053, %v1055
    %v1057 = vrot.slane %v1049, %v1056
    %v1059 = vunpack.c.l.s4 1966171168
    %v1060 = vunpack.c.0.s8 %v1059
    %v1061 = vlaneseq
    %v1062 = vshrl.u32 %v1061, 7
    %v1063 = vsub.s32 %v1060, %v1062
    %v1064 = vrot.slane %v1050, %v1063
    %v1065 = vcombine.high %v1057, %v1057
    %v1066 = vcombine.high %v1064, %v1064
    %v1067 = vlaneseq
    %v1068 = vshrl.u32 %v1067, 7
    %v1069 = vsub.s32 0, %v1068
    %v1070 = vrot.slane %v1033, %v1069
    %v1071 = vlaneseq
    %v1072 = vshrl.u32 %v1071, 7
    %v1073 = vsub.s32 0, %v1072
    %v1074 = vrot.slane %v1040, %v1073
    %v1075 = vlaneseq
    %v1076 = vshrl.u32 %v1075, 7
    %v1077 = vsub.s32 0, %v1076
    %v1078 = vrot.slane %v1041, %v1077
    %v1079 = vlaneseq
    %v1080 = vshrl.u32 %v1079, 7
    %v1081 = vsub.s32 0, %v1080
    %v1082 = vrot.slane %v1042, %v1081
    %v1083 = vlaneseq
    %v1084 = vshrl.u32 %v1083, 7
    %v1085 = vsub.s32 0, %v1084
    %v1086 = vrot.slane %v1057, %v1085
    %v1087 = vlaneseq
    %v1088 = vshrl.u32 %v1087, 7
    %v1089 = vsub.s32 0, %v1088
    %v1090 = vrot.slane %v1064, %v1089
    %v1091 = vlaneseq
    %v1092 = vshrl.u32 %v1091, 7
    %v1093 = vsub.s32 0, %v1092
    %v1094 = vrot.slane %v1065, %v1093
    %v1095 = vlaneseq
    %v1096 = vshrl.u32 %v1095, 7
    %v1097 = vsub.s32 0, %v1096
    %v1098 = vrot.slane %v1066, %v1097
    %1107 = vrot.lane.b32.xlu0 %v892, 64
    %v1108 = vpop.permute.xlu0 %1107
    %1109 = vrot.lane.b32.xlu0 %v893, 64
    %v1110 = vpop.permute.xlu0 %1109
    %v1113 = vadd.f32 %v1070, %v1108
    %v1114 = vadd.f32 %v1074, %v1108
    %v1115 = vadd.f32 %v1078, %v1108
    %v1116 = vadd.f32 %v1082, %v1108
    %v1117 = vadd.f32 %v1086, %v1110
    %v1118 = vadd.f32 %v1090, %v1110
    %v1119 = vadd.f32 %v1094, %v1110
    %v1120 = vadd.f32 %v1098, %v1110
    %v1121 = vadd.f32 %v1113, %v989
    %v1122 = vadd.f32 %v1114, %v1011
    %v1123 = vadd.f32 %v1115, %v994
    %v1124 = vadd.f32 %v1116, %v1012
    %v1125 = vadd.f32 %v1117, %v999
    %v1126 = vadd.f32 %v1118, %v1013
    %v1127 = vadd.f32 %v1119, %v1004
    %v1128 = vadd.f32 %v1120, %v1014
    %v1129 = vsel %vm368, %v1121, 0.0
    %v1130 = vsel %vm368, %v1125, 0.0
    %v1131 = vadd.f32 %v1129, %v1130
    %1132 = vadd.xlane.f32.xlu0 %v1131
    %v1133 = vpop.xlane.xlu0 %1132
    %v1134 = vsel %vm368, %v1122, 0.0
    %v1135 = vsel %vm368, %v1126, 0.0
    %v1136 = vadd.f32 %v1134, %v1135
    %1137 = vadd.xlane.f32.xlu0 %v1136
    %v1138 = vpop.xlane.xlu0 %1137
    %v1139 = vsel %vm368, %v1123, 0.0
    %v1140 = vsel %vm368, %v1127, 0.0
    %v1141 = vadd.f32 %v1139, %v1140
    %1142 = vadd.xlane.f32.xlu0 %v1141
    %v1143 = vpop.xlane.xlu0 %1142
    %v1144 = vsel %vm368, %v1124, 0.0
    %v1145 = vsel %vm368, %v1128, 0.0
    %v1146 = vadd.f32 %v1144, %v1145
    %1147 = vadd.xlane.f32.xlu0 %v1146
    %v1148 = vpop.xlane.xlu0 %1147
    %v1149 = vmul.f32 %v1133, %v389
    %v1150 = vmul.f32 %v1138, %v389
    %v1151 = vmul.f32 %v1143, %v389
    %v1152 = vmul.f32 %v1148, %v389
    %v1153 = vsub.f32 %v1121, %v1149
    %v1154 = vsub.f32 %v1122, %v1150
    %v1155 = vsub.f32 %v1123, %v1151
    %v1156 = vsub.f32 %v1124, %v1152
    %v1157 = vsub.f32 %v1125, %v1149
    %v1158 = vsub.f32 %v1126, %v1150
    %v1159 = vsub.f32 %v1127, %v1151
    %v1160 = vsub.f32 %v1128, %v1152
    %v1161 = vmul.f32 %v1153, %v1153
    %v1162 = vmul.f32 %v1154, %v1154
    %v1163 = vmul.f32 %v1155, %v1155
    %v1164 = vmul.f32 %v1156, %v1156
    %v1165 = vmul.f32 %v1157, %v1157
    %v1166 = vmul.f32 %v1158, %v1158
    %v1167 = vmul.f32 %v1159, %v1159
    %v1168 = vmul.f32 %v1160, %v1160
    %v1169 = vsel %vm368, %v1161, 0.0
    %v1170 = vsel %vm368, %v1165, 0.0
    %v1171 = vadd.f32 %v1169, %v1170
    %1172 = vadd.xlane.f32.xlu0 %v1171
    %v1173 = vpop.xlane.xlu0 %1172
    %v1174 = vsel %vm368, %v1162, 0.0
    %v1175 = vsel %vm368, %v1166, 0.0
    %v1176 = vadd.f32 %v1174, %v1175
    %1177 = vadd.xlane.f32.xlu0 %v1176
    %v1178 = vpop.xlane.xlu0 %1177
    %v1179 = vsel %vm368, %v1163, 0.0
    %v1180 = vsel %vm368, %v1167, 0.0
    %v1181 = vadd.f32 %v1179, %v1180
    %1182 = vadd.xlane.f32.xlu0 %v1181
    %v1183 = vpop.xlane.xlu0 %1182
    %v1184 = vsel %vm368, %v1164, 0.0
    %v1185 = vsel %vm368, %v1168, 0.0
    %v1186 = vadd.f32 %v1184, %v1185
    %1187 = vadd.xlane.f32.xlu0 %v1186
    %v1188 = vpop.xlane.xlu0 %1187
    %v1189 = vmul.f32 %v1173, %v389
    %v1190 = vmul.f32 %v1178, %v389
    %v1191 = vmul.f32 %v1183, %v389
    %v1192 = vmul.f32 %v1188, %v389
    %v1193 = vadd.f32 %v1189, 1e-05
    %v1194 = vadd.f32 %v1190, 1e-05
    %v1195 = vadd.f32 %v1191, 1e-05
    %v1196 = vadd.f32 %v1192, 1e-05
    %v1197 = vrsqrt.pop %v1193
    %v1198 = vrsqrt.pop %v1194
    %v1199 = vrsqrt.pop %v1195
    %v1200 = vrsqrt.pop %v1196
    %v1201 = vmul.f32 %v1153, %v1197
    %v1202 = vmul.f32 %v1154, %v1198
    %v1203 = vmul.f32 %v1155, %v1199
    %v1204 = vmul.f32 %v1156, %v1200
    %v1205 = vmul.f32 %v1157, %v1197
    %v1206 = vmul.f32 %v1158, %v1198
    %v1207 = vmul.f32 %v1159, %v1199
    %v1208 = vmul.f32 %v1160, %v1200
    %v1209 = vmax.f32 %v1201, 0.0
    %v1210 = vmax.f32 %v1202, 0.0
    %v1211 = vmax.f32 %v1203, 0.0
    %v1212 = vmax.f32 %v1204, 0.0
    %v1213 = vmax.f32 %v1205, 0.0
    %v1214 = vmax.f32 %v1206, 0.0
    %v1215 = vmax.f32 %v1207, 0.0
    %v1216 = vmax.f32 %v1208, 0.0
    %v1217 = vadd.f32 %v458, %v1209
    %v1218 = vadd.f32 %v459, %v1210
    %v1219 = vadd.f32 %v460, %v1211
    %v1220 = vadd.f32 %v461, %v1212
    %v1221 = vadd.f32 %v462, %v1213
    %v1222 = vadd.f32 %v463, %v1214
    %v1223 = vadd.f32 %v464, %v1215
    %v1224 = vadd.f32 %v465, %v1216
    %v1225 = vxor.u32 %v1217, 2147483648
    %v1226 = vxor.u32 %v1218, 2147483648
    %v1227 = vxor.u32 %v1219, 2147483648
    %v1228 = vxor.u32 %v1220, 2147483648
    %v1229 = vxor.u32 %v1221, 2147483648
    %v1230 = vxor.u32 %v1222, 2147483648
    %v1231 = vxor.u32 %v1223, 2147483648
    %v1232 = vxor.u32 %v1224, 2147483648
    %v1233 = vmul.f32 %v1225, 1.442695
    %v1234 = vpow.pop %v1233
    %v1235 = vmul.f32 %v1226, 1.442695
    %v1236 = vpow.pop %v1235
    %v1237 = vmul.f32 %v1227, 1.442695
    %v1238 = vpow.pop %v1237
    %v1239 = vmul.f32 %v1228, 1.442695
    %v1240 = vpow.pop %v1239
    %v1241 = vmul.f32 %v1229, 1.442695
    %v1242 = vpow.pop %v1241
    %v1243 = vmul.f32 %v1230, 1.442695
    %v1244 = vpow.pop %v1243
    %v1245 = vmul.f32 %v1231, 1.442695
    %v1246 = vpow.pop %v1245
    %v1247 = vmul.f32 %v1232, 1.442695
    %v1248 = vpow.pop %v1247
    %v1249 = vadd.f32 %v1234, 1.0
    %v1250 = vadd.f32 %v1236, 1.0
    %v1251 = vadd.f32 %v1238, 1.0
    %v1252 = vadd.f32 %v1240, 1.0
    %v1253 = vadd.f32 %v1242, 1.0
    %v1254 = vadd.f32 %v1244, 1.0
    %v1255 = vadd.f32 %v1246, 1.0
    %v1256 = vadd.f32 %v1248, 1.0
    %v1257 = vrcp.pop %v1249
    %v1258 = vmul.f32 1.0, %v1257
    %v1259 = vrcp.pop %v1250
    %v1260 = vmul.f32 1.0, %v1259
    %v1261 = vrcp.pop %v1251
    %v1262 = vmul.f32 1.0, %v1261
    %v1263 = vrcp.pop %v1252
    %v1264 = vmul.f32 1.0, %v1263
    %v1265 = vrcp.pop %v1253
    %v1266 = vmul.f32 1.0, %v1265
    %v1267 = vrcp.pop %v1254
    %v1268 = vmul.f32 1.0, %v1267
    %v1269 = vrcp.pop %v1255
    %v1270 = vmul.f32 1.0, %v1269
    %v1271 = vrcp.pop %v1256
    %v1272 = vmul.f32 1.0, %v1271
    %v1273 = vsel %vm368, %v1258, -inf
    %v1274 = vrot.slane %v1273, 4
    %v1275 = vmax.f32 %v1273, %v1274
    %v1276 = vrot.slane %v1275, 2
    %v1277 = vmax.f32 %v1275, %v1276
    %v1278 = vrot.slane %v1277, 1
    %v1279 = vmax.f32 %v1277, %v1278
    %v1280 = vsel %vm368, %v1260, -inf
    %v1281 = vrot.slane %v1280, 4
    %v1282 = vmax.f32 %v1280, %v1281
    %v1283 = vrot.slane %v1282, 2
    %v1284 = vmax.f32 %v1282, %v1283
    %v1285 = vrot.slane %v1284, 1
    %v1286 = vmax.f32 %v1284, %v1285
    %v1287 = vsel %vm368, %v1262, -inf
    %v1288 = vrot.slane %v1287, 4
    %v1289 = vmax.f32 %v1287, %v1288
    %v1290 = vrot.slane %v1289, 2
    %v1291 = vmax.f32 %v1289, %v1290
    %v1292 = vrot.slane %v1291, 1
    %v1293 = vmax.f32 %v1291, %v1292
    %v1294 = vsel %vm368, %v1264, -inf
    %v1295 = vrot.slane %v1294, 4
    %v1296 = vmax.f32 %v1294, %v1295
    %v1297 = vrot.slane %v1296, 2
    %v1298 = vmax.f32 %v1296, %v1297
    %v1299 = vrot.slane %v1298, 1
    %v1300 = vmax.f32 %v1298, %v1299
    %v1301 = vsel %vm368, %v1266, -inf
    %v1302 = vrot.slane %v1301, 4
    %v1303 = vmax.f32 %v1301, %v1302
    %v1304 = vrot.slane %v1303, 2
    %v1305 = vmax.f32 %v1303, %v1304
    %v1306 = vrot.slane %v1305, 1
    %v1307 = vmax.f32 %v1305, %v1306
    %v1308 = vsel %vm368, %v1268, -inf
    %v1309 = vrot.slane %v1308, 4
    %v1310 = vmax.f32 %v1308, %v1309
    %v1311 = vrot.slane %v1310, 2
    %v1312 = vmax.f32 %v1310, %v1311
    %v1313 = vrot.slane %v1312, 1
    %v1314 = vmax.f32 %v1312, %v1313
    %v1315 = vsel %vm368, %v1270, -inf
    %v1316 = vrot.slane %v1315, 4
    %v1317 = vmax.f32 %v1315, %v1316
    %v1318 = vrot.slane %v1317, 2
    %v1319 = vmax.f32 %v1317, %v1318
    %v1320 = vrot.slane %v1319, 1
    %v1321 = vmax.f32 %v1319, %v1320
    %v1322 = vsel %vm368, %v1272, -inf
    %v1323 = vrot.slane %v1322, 4
    %v1324 = vmax.f32 %v1322, %v1323
    %v1325 = vrot.slane %v1324, 2
    %v1326 = vmax.f32 %v1324, %v1325
    %v1327 = vrot.slane %v1326, 1
    %v1328 = vmax.f32 %v1326, %v1327
    %v1329 = vsub.f32 %v1258, %v1279
    %v1330 = vsub.f32 %v1260, %v1286
    %v1331 = vsub.f32 %v1262, %v1293
    %v1332 = vsub.f32 %v1264, %v1300
    %v1333 = vsub.f32 %v1266, %v1307
    %v1334 = vsub.f32 %v1268, %v1314
    %v1335 = vsub.f32 %v1270, %v1321
    %v1336 = vsub.f32 %v1272, %v1328
    %v1337 = vmul.f32 %v1329, 1.442695
    %v1338 = vpow.pop %v1337
    %v1339 = vmul.f32 %v1330, 1.442695
    %v1340 = vpow.pop %v1339
    %v1341 = vmul.f32 %v1331, 1.442695
    %v1342 = vpow.pop %v1341
    %v1343 = vmul.f32 %v1332, 1.442695
    %v1344 = vpow.pop %v1343
    %v1345 = vmul.f32 %v1333, 1.442695
    %v1346 = vpow.pop %v1345
    %v1347 = vmul.f32 %v1334, 1.442695
    %v1348 = vpow.pop %v1347
    %v1349 = vmul.f32 %v1335, 1.442695
    %v1350 = vpow.pop %v1349
    %v1351 = vmul.f32 %v1336, 1.442695
    %v1352 = vpow.pop %v1351
    %v1353 = vsel %vm368, %v1338, 0.0
    %v1354 = vrot.slane %v1353, 4
    %v1355 = vadd.f32 %v1353, %v1354
    %v1356 = vrot.slane %v1355, 2
    %v1357 = vadd.f32 %v1355, %v1356
    %v1358 = vrot.slane %v1357, 1
    %v1359 = vadd.f32 %v1357, %v1358
    %v1360 = vsel %vm368, %v1340, 0.0
    %v1361 = vrot.slane %v1360, 4
    %v1362 = vadd.f32 %v1360, %v1361
    %v1363 = vrot.slane %v1362, 2
    %v1364 = vadd.f32 %v1362, %v1363
    %v1365 = vrot.slane %v1364, 1
    %v1366 = vadd.f32 %v1364, %v1365
    %v1367 = vsel %vm368, %v1342, 0.0
    %v1368 = vrot.slane %v1367, 4
    %v1369 = vadd.f32 %v1367, %v1368
    %v1370 = vrot.slane %v1369, 2
    %v1371 = vadd.f32 %v1369, %v1370
    %v1372 = vrot.slane %v1371, 1
    %v1373 = vadd.f32 %v1371, %v1372
    %v1374 = vsel %vm368, %v1344, 0.0
    %v1375 = vrot.slane %v1374, 4
    %v1376 = vadd.f32 %v1374, %v1375
    %v1377 = vrot.slane %v1376, 2
    %v1378 = vadd.f32 %v1376, %v1377
    %v1379 = vrot.slane %v1378, 1
    %v1380 = vadd.f32 %v1378, %v1379
    %v1381 = vsel %vm368, %v1346, 0.0
    %v1382 = vrot.slane %v1381, 4
    %v1383 = vadd.f32 %v1381, %v1382
    %v1384 = vrot.slane %v1383, 2
    %v1385 = vadd.f32 %v1383, %v1384
    %v1386 = vrot.slane %v1385, 1
    %v1387 = vadd.f32 %v1385, %v1386
    %v1388 = vsel %vm368, %v1348, 0.0
    %v1389 = vrot.slane %v1388, 4
    %v1390 = vadd.f32 %v1388, %v1389
    %v1391 = vrot.slane %v1390, 2
    %v1392 = vadd.f32 %v1390, %v1391
    %v1393 = vrot.slane %v1392, 1
    %v1394 = vadd.f32 %v1392, %v1393
    %v1395 = vsel %vm368, %v1350, 0.0
    %v1396 = vrot.slane %v1395, 4
    %v1397 = vadd.f32 %v1395, %v1396
    %v1398 = vrot.slane %v1397, 2
    %v1399 = vadd.f32 %v1397, %v1398
    %v1400 = vrot.slane %v1399, 1
    %v1401 = vadd.f32 %v1399, %v1400
    %v1402 = vsel %vm368, %v1352, 0.0
    %v1403 = vrot.slane %v1402, 4
    %v1404 = vadd.f32 %v1402, %v1403
    %v1405 = vrot.slane %v1404, 2
    %v1406 = vadd.f32 %v1404, %v1405
    %v1407 = vrot.slane %v1406, 1
    %v1408 = vadd.f32 %v1406, %v1407
    %v1409 = vrcp.pop %v1359
    %v1410 = vmul.f32 %v1338, %v1409
    %v1411 = vrcp.pop %v1366
    %v1412 = vmul.f32 %v1340, %v1411
    %v1413 = vrcp.pop %v1373
    %v1414 = vmul.f32 %v1342, %v1413
    %v1415 = vrcp.pop %v1380
    %v1416 = vmul.f32 %v1344, %v1415
    %v1417 = vrcp.pop %v1387
    %v1418 = vmul.f32 %v1346, %v1417
    %v1419 = vrcp.pop %v1394
    %v1420 = vmul.f32 %v1348, %v1419
    %v1421 = vrcp.pop %v1401
    %v1422 = vmul.f32 %v1350, %v1421
    %v1423 = vrcp.pop %v1408
    %v1424 = vmul.f32 %v1352, %v1423
    %v1425 = vrot.slane %v1108, 4
    %v1426 = vrot.slane %v1110, 4
    %v1429 = vmul.f32 %v1410, %v1425
    %v1430 = vmul.f32 %v1412, %v1425
    %v1431 = vmul.f32 %v1414, %v1425
    %v1432 = vmul.f32 %v1416, %v1425
    %v1433 = vmul.f32 %v1418, %v1426
    %v1434 = vmul.f32 %v1420, %v1426
    %v1435 = vmul.f32 %v1422, %v1426
    %v1436 = vmul.f32 %v1424, %v1426
    %v1437 = vsel %vm368, %v1429, 0.0
    %v1438 = vrot.slane %v1437, 4
    %v1439 = vadd.f32 %v1437, %v1438
    %v1440 = vrot.slane %v1439, 2
    %v1441 = vadd.f32 %v1439, %v1440
    %v1442 = vrot.slane %v1441, 1
    %v1443 = vadd.f32 %v1441, %v1442
    %v1444 = vsel %vm368, %v1430, 0.0
    %v1445 = vrot.slane %v1444, 4
    %v1446 = vadd.f32 %v1444, %v1445
    %v1447 = vrot.slane %v1446, 2
    %v1448 = vadd.f32 %v1446, %v1447
    %v1449 = vrot.slane %v1448, 1
    %v1450 = vadd.f32 %v1448, %v1449
    %v1451 = vsel %vm368, %v1431, 0.0
    %v1452 = vrot.slane %v1451, 4
    %v1453 = vadd.f32 %v1451, %v1452
    %v1454 = vrot.slane %v1453, 2
    %v1455 = vadd.f32 %v1453, %v1454
    %v1456 = vrot.slane %v1455, 1
    %v1457 = vadd.f32 %v1455, %v1456
    %v1458 = vsel %vm368, %v1432, 0.0
    %v1459 = vrot.slane %v1458, 4
    %v1460 = vadd.f32 %v1458, %v1459
    %v1461 = vrot.slane %v1460, 2
    %v1462 = vadd.f32 %v1460, %v1461
    %v1463 = vrot.slane %v1462, 1
    %v1464 = vadd.f32 %v1462, %v1463
    %v1465 = vsel %vm368, %v1433, 0.0
    %v1466 = vrot.slane %v1465, 4
    %v1467 = vadd.f32 %v1465, %v1466
    %v1468 = vrot.slane %v1467, 2
    %v1469 = vadd.f32 %v1467, %v1468
    %v1470 = vrot.slane %v1469, 1
    %v1471 = vadd.f32 %v1469, %v1470
    %v1472 = vsel %vm368, %v1434, 0.0
    %v1473 = vrot.slane %v1472, 4
    %v1474 = vadd.f32 %v1472, %v1473
    %v1475 = vrot.slane %v1474, 2
    %v1476 = vadd.f32 %v1474, %v1475
    %v1477 = vrot.slane %v1476, 1
    %v1478 = vadd.f32 %v1476, %v1477
    %v1479 = vsel %vm368, %v1435, 0.0
    %v1480 = vrot.slane %v1479, 4
    %v1481 = vadd.f32 %v1479, %v1480
    %v1482 = vrot.slane %v1481, 2
    %v1483 = vadd.f32 %v1481, %v1482
    %v1484 = vrot.slane %v1483, 1
    %v1485 = vadd.f32 %v1483, %v1484
    %v1486 = vsel %vm368, %v1436, 0.0
    %v1487 = vrot.slane %v1486, 4
    %v1488 = vadd.f32 %v1486, %v1487
    %v1489 = vrot.slane %v1488, 2
    %v1490 = vadd.f32 %v1488, %v1489
    %v1491 = vrot.slane %v1490, 1
    %v1492 = vadd.f32 %v1490, %v1491
    %v1493 = vrot.slane %v892, 4
    %v1494 = vrot.slane %v893, 4
    %v1505 = vrot.slane %v1450, 7
    %v1506 = vsel %vm747, %v1505, %v1443
    %v1507 = vsel %vm749, %v1505, %v1506
    %v1508 = vrot.slane %v1457, 6
    %v1509 = vsel %vm752, %v1508, %v1507
    %v1510 = vsel %vm754, %v1508, %v1509
    %v1511 = vrot.slane %v1464, 5
    %v1512 = vsel %vm757, %v1511, %v1510
    %v1513 = vsel %vm759, %v1511, %v1512
    %v1514 = vrot.slane %v1478, 7
    %v1515 = vsel %vm747, %v1514, %v1471
    %v1516 = vsel %vm749, %v1514, %v1515
    %v1517 = vrot.slane %v1485, 6
    %v1518 = vsel %vm752, %v1517, %v1516
    %v1519 = vsel %vm754, %v1517, %v1518
    %v1520 = vrot.slane %v1492, 5
    %v1521 = vsel %vm757, %v1520, %v1519
    %v1522 = vsel %vm759, %v1520, %v1521
    %v1525 = vadd.f32 %v1493, %v1513
    %v1526 = vadd.f32 %v1494, %v1522
    %v1527 = vsel %vm368, %v1525, 0.0
    %v1528 = vsel %vm368, %v1526, 0.0
    %v1529 = vadd.f32 %v1527, %v1528
    %1530 = vadd.xlane.f32.xlu0 %v1529
    %v1531 = vpop.xlane.xlu0 %1530
    %v1532 = vmul.f32 %v1531, %v389
    %v1533 = vsub.f32 %v1525, %v1532
    %v1534 = vsub.f32 %v1526, %v1532
    %v1535 = vmul.f32 %v1533, %v1533
    %v1536 = vmul.f32 %v1534, %v1534
    %v1537 = vsel %vm368, %v1535, 0.0
    %v1538 = vsel %vm368, %v1536, 0.0
    %v1539 = vadd.f32 %v1537, %v1538
    %1540 = vadd.xlane.f32.xlu0 %v1539
    %v1541 = vpop.xlane.xlu0 %1540
    %v1542 = vmul.f32 %v1541, %v389
    %v1543 = vadd.f32 %v1542, 1e-05
    %v1544 = vrsqrt.pop %v1543
    %v1545 = vmul.f32 %v1533, %v1544
    %v1546 = vmul.f32 %v1534, %v1544
    %v1547 = vadd.f32 %v796, %v1545
    %v1548 = vadd.f32 %v797, %v1546
    %v1549 = vmax.f32 %v1547, 0.0
    %v1550 = vmax.f32 %v1548, 0.0
    %1551 = vst.msk [vmem:[#allocation2] sm:$0xf] %vm368, %v1549
    %1552 = vst.msk [vmem:[#allocation2 + $0x4] sm:$0xf] %vm368, %v1550
    %1553 = vst.msk [vmem:[%s7] sm:$0xf] %vm368, %v1217
    %1554 = vst.msk [vmem:[%s7 + $0x4] sm:$0xf] %vm368, %v1218
    %1555 = vst.msk [vmem:[%s7 + $0x8] sm:$0xf] %vm368, %v1219
    %1556 = vst.msk [vmem:[%s7 + $0xc] sm:$0xf] %vm368, %v1220
    %1557 = vst.msk [vmem:[%s7 + $0x10] sm:$0xf] %vm368, %v1221
    %1558 = vst.msk [vmem:[%s7 + $0x14] sm:$0xf] %vm368, %v1222
    %1559 = vst.msk [vmem:[%s7 + $0x18] sm:$0xf] %vm368, %v1223
    %1560 = vst.msk [vmem:[%s7 + $0x1c] sm:$0xf] %vm368, %v1224
    // Predicated region
    $region26: #{gnn_forward.1} parent=1 // pred_check
      _
    $region27: #{gnn_forward.1} parent=1 // pred_check_branch
      %1562 = sbr.rel (0) target = $region29
    $region28: #{gnn_forward.1} parent=1 // pred_region
      %s1564 = ssub.s32 128, 128
      %1565 = vsyncadd [#allocation3], %s1564
      %s1566 = sshll.u32 [#allocation2], 4
      %s1567 = int_to_ptr.vmem [resolvable:$true] %s1566
      %1572 = dma.vmem_to_hbm [thread:$0]  %s1567, 128, %s6, [#allocation3], 64, 64, 4
    $region29: #{gnn_forward.1} parent=1 // pred_fallthru
      _
    // Predicated region
    $region30: #{gnn_forward.1} parent=1 // pred_check
      _
    $region31: #{gnn_forward.1} parent=1 // pred_check_branch
      %1574 = sbr.rel (0) target = $region33
    $region32: #{gnn_forward.1} parent=1 // pred_region
      _
    $region33: #{gnn_forward.1} parent=1 // pred_fallthru
      _
    // Predicated region
    $region34: #{gnn_forward.1} parent=1 // pred_check
      _
    $region35: #{gnn_forward.1} parent=1 // pred_check_branch
      %1576 = sbr.rel (0) target = $region37
    $region36: #{gnn_forward.1} parent=1 // pred_region
      %1577 = dma.done [#allocation3], 128
    $region37: #{gnn_forward.1} parent=1 // pred_fallthru
      _
    // Predicated region
    $region38: #{gnn_forward.1} parent=1 // pred_check
      _
    $region39: #{gnn_forward.1} parent=1 // pred_check_branch
      %1579 = sbr.rel (0) target = $region41
    $region40: #{gnn_forward.1} parent=1 // pred_region
      _
    $region41: #{gnn_forward.1} parent=1 // pred_fallthru
      _
    %1580 = vsyncpa [#allocation3], 1

</llo_original>
